<compile_context>
chip_gen: v7x
topology: tpu7x:2x2x1
jax: 0.10.0
libtpu: 0.0.40
codegen_flags: <defaults>
</compile_context>

<pallas_src>
import jax
import jax.numpy as jnp
from jax.experimental import pallas as pl
from jax.experimental.pallas import tpu as pltpu

NC_PAD = 128  # classes padded to one full lane width


def diffsmooth_forward(x_nchw, params, noise):
    """x_nchw: (B, C, H, W) f32; noise: (m, C, H, W) f32 -> (B, num_classes)."""
    B, C, H, W = x_nchw.shape
    m = noise.shape[0]
    HW = H * W
    K = C * HW
    wd, bd = params["wd"], params["bd"]
    wc, bc = params["wc"], params["bc"]
    NC = wc.shape[1]
    assert NC <= NC_PAD

    hp = jax.lax.Precision.HIGHEST

    # ---- one-time wrapper precompute (tiny XLA ops; would live at init) ----
    # Fold the 1x1-conv "diffusion" into the classifier:
    #   flatten(diffusion(x)) @ wc + bc  ==  x_flat @ w_eff + b_eff
    wc3 = wc.reshape(C, HW, NC)                               # [co, hw, n]
    w_eff = jnp.einsum("io,ohn->ihn", wd, wc3, precision=hp).reshape(K, NC)
    b_eff = bc + jnp.einsum("o,ohn->n", bd, wc3, precision=hp)

    # Grid-invariant per-noise logit offsets (classifier is linear):
    #   logits_i = base + noise_i_flat @ wc
    noise_flat = noise.reshape(m, K)                          # NCHW flatten
    noff = jnp.dot(noise_flat, wc, precision=hp)              # (m, NC)

    # Lane-dense class padding: zero weights / zero noise-offsets and a very
    # negative bias on padded columns -> exactly zero probability (f32).
    w_eff_p = jnp.pad(w_eff, ((0, 0), (0, NC_PAD - NC)))
    b_eff_p = jnp.pad(b_eff.reshape(1, NC), ((0, 0), (0, NC_PAD - NC)),
                      constant_values=-1e30)
    noff_p = jnp.pad(noff, ((0, 0), (0, NC_PAD - NC)))

    # NCHW row-major flatten == torch.Tensor.view(B, -1): free reshape.
    x_flat = x_nchw.reshape(B, K)

    bt = min(B, 512)                 # batch tile (rows per grid step)
    grid_b = pl.cdiv(B, bt)
    # NOTE: ragged last tile (B % bt != 0) computes softmax on unspecified pad
    # rows; rows are independent and the writeback is bounds-masked, so valid
    # outputs are unaffected.

    def kernel(x_ref, w_ref, b_ref, noff_ref, conf_ref):
        # ---- one MXU pass: base logits for this batch tile ----
        base = jnp.dot(x_ref[...], w_ref[...],
                       preferred_element_type=jnp.float32) + b_ref[...]

        # ---- softmax over classes per noise, mean over m (VPU, unrolled) ----
        conf = None
        for i in range(m):                                    # m is small
            logits = base + noff_ref[i:i + 1, :]              # (bt, NC_PAD)
            mx = jnp.max(logits, axis=-1, keepdims=True)
            e = jnp.exp(logits - mx)
            inv = 1.0 / jnp.sum(e, axis=-1, keepdims=True)    # narrow divide
            p = e * inv
            conf = p if conf is None else conf + p
        conf_ref[...] = conf * (1.0 / m)

    cost = pl.CostEstimate(
        flops=2 * B * K * NC_PAD + 6 * m * B * NC_PAD,
        transcendentals=m * B * NC_PAD,
        bytes_accessed=4 * (B * K + K * NC_PAD + NC_PAD
                            + m * NC_PAD + B * NC_PAD),
    )

    conf_p = pl.pallas_call(
        kernel,
        out_shape=jax.ShapeDtypeStruct((B, NC_PAD), jnp.float32),
        grid=(grid_b,),
        in_specs=[
            pl.BlockSpec((bt, K), lambda i: (i, 0)),          # x tile (pipelined)
            pl.BlockSpec((K, NC_PAD), lambda i: (0, 0)),      # w_eff (resident)
            pl.BlockSpec((1, NC_PAD), lambda i: (0, 0)),      # b_eff (resident)
            pl.BlockSpec((m, NC_PAD), lambda i: (0, 0)),      # noise offsets
        ],
        out_specs=pl.BlockSpec((bt, NC_PAD), lambda i: (i, 0)),
        compiler_params=pltpu.CompilerParams(
            dimension_semantics=("parallel",),
            vmem_limit_bytes=48 * 1024 * 1024,                # bt=512 headroom
        ),
        cost_estimate=cost,
    )(x_flat, w_eff_p, b_eff_p, noff_p)

    return conf_p[:, :NC]


def _reference(x_nchw, params, noise):
    B, C, H, W = x_nchw.shape
    m = noise.shape[0]
    hp = jax.lax.Precision.HIGHEST
    x2d = jnp.transpose(x_nchw, (0, 2, 3, 1)).reshape(B * H * W, C)
    y = jnp.dot(x2d, params["wd"], precision=hp) + params["bd"]
    y = jnp.transpose(y.reshape(B, H, W, C), (0, 3, 1, 2)).reshape(B, -1)
    conf = 0.0
    for i in range(m):
        logits = jnp.dot(y + noise[i].reshape(1, -1), params["wc"],
                         precision=hp) + params["bc"]
        conf = conf + jax.nn.softmax(logits, axis=1)
    return conf / m


if __name__ == "__main__":
    # cifar10-like shapes, kept small: batch=2, 3x32x32 images, m=5 noises.
    B, C, H, W = 2, 3, 32, 32
    m = 5
    num_classes = 10
    local_smoothing_sd = 0.25

    key = jax.random.PRNGKey(0)
    k_x, k_n, k_wd, k_bd, k_wc, k_bc = jax.random.split(key, 6)

    x = jax.random.normal(k_x, (B, C, H, W), dtype=jnp.float32)
    # fixed local smoothing noise (fix_local_noise=True path), scaled by sd
    noise = jax.random.normal(k_n, (m, C, H, W), dtype=jnp.float32) * local_smoothing_sd

    params = {
        # synthetic "diffusion" (1x1 conv): near-identity channel mixing
        "wd": jnp.eye(C, dtype=jnp.float32)
              + 0.05 * jax.random.normal(k_wd, (C, C), dtype=jnp.float32),
        "bd": 0.01 * jax.random.normal(k_bd, (C,), dtype=jnp.float32),
        # synthetic "classifier": flatten -> linear(C*H*W -> 10)
        "wc": 0.02 * jax.random.normal(k_wc, (C * H * W, num_classes),
                                       dtype=jnp.float32),
        "bc": 0.01 * jax.random.normal(k_bc, (num_classes,), dtype=jnp.float32),
    }

    conf = jax.block_until_ready(diffsmooth_forward(x, params, noise))
    ref = _reference(x, params, noise)

    assert conf.shape == (B, num_classes)
    # Folding/distributivity rearrangements ((wd-folded W, base + n@Wc) vs the
    # reference's sequential HIGHEST-precision matmuls) stay in f32; allow a
    # modest tolerance on probabilities.
    assert jnp.allclose(conf, ref, atol=1e-3, rtol=1e-3), "mismatch vs reference"
    # each row of confidence should sum to ~1 (exact softmax normalization)
    assert jnp.allclose(jnp.sum(conf, axis=1), jnp.ones((B,)), atol=1e-5)

    print("KERNEL_OK")
</pallas_src>

<mosaic_0001>
module attributes {stable_mosaic.version = 11 : i64} {
  func.func @kernel(%arg0: i32, %arg1: memref<2x3072xf32, #tpu.memory_space<vmem>>, %arg2: memref<3072x128xf32, #tpu.memory_space<vmem>>, %arg3: memref<1x128xf32, #tpu.memory_space<vmem>>, %arg4: memref<5x128xf32, #tpu.memory_space<vmem>>, %arg5: memref<2x128xf32, #tpu.memory_space<vmem>>) attributes {dimension_semantics = [#tpu.dimension_semantics<parallel>], iteration_bounds = array<i64: 1>, scalar_prefetch = 0 : i64, scratch_operands = 0 : i64, tpu.core_type = #tpu.core_type<tc>, window_params = [{transform_indices = @transform_0, window_bounds = array<i64: 2, 3072>}, {pipeline_mode = #tpu.pipeline_mode<synchronous>, transform_indices = @transform_1, window_bounds = array<i64: 3072, 128>}, {pipeline_mode = #tpu.pipeline_mode<synchronous>, transform_indices = @transform_2, window_bounds = array<i64: 1, 128>}, {pipeline_mode = #tpu.pipeline_mode<synchronous>, transform_indices = @transform_3, window_bounds = array<i64: 5, 128>}, {transform_indices = @transform_4, window_bounds = array<i64: 2, 128>}]} {
    %c0 = arith.constant 0 : index
    %c0_0 = arith.constant 0 : index
    %0 = vector.load %arg1[%c0, %c0_0] : memref<2x3072xf32, #tpu.memory_space<vmem>>, vector<2x3072xf32>
    %c0_1 = arith.constant 0 : index
    %c0_2 = arith.constant 0 : index
    %1 = vector.load %arg2[%c0_1, %c0_2] : memref<3072x128xf32, #tpu.memory_space<vmem>>, vector<3072x128xf32>
    %cst = arith.constant dense<0.000000e+00> : vector<2x128xf32>
    %2 = tpu.matmul %0, %1, %cst {dimension_numbers = #tpu.dot_dimension_numbers<[1], [0], [0], [1], [0, 0, 1, 1], [], []>} : vector<2x3072xf32>, vector<3072x128xf32>, vector<2x128xf32> -> vector<2x128xf32>
    %c0_3 = arith.constant 0 : index
    %c0_4 = arith.constant 0 : index
    %3 = vector.load %arg3[%c0_3, %c0_4] : memref<1x128xf32, #tpu.memory_space<vmem>>, vector<1x128xf32>
    %4 = vector.broadcast %3 : vector<1x128xf32> to vector<2x128xf32>
    %5 = arith.addf %2, %4 : vector<2x128xf32>
    %c0_5 = arith.constant 0 : index
    %c0_6 = arith.constant 0 : index
    %6 = vector.load %arg4[%c0_5, %c0_6] : memref<5x128xf32, #tpu.memory_space<vmem>>, vector<1x128xf32>
    %7 = vector.broadcast %6 : vector<1x128xf32> to vector<2x128xf32>
    %8 = arith.addf %5, %7 : vector<2x128xf32>
    %cst_7 = arith.constant dense<0xFF800000> : vector<2xf32>
    %9 = vector.multi_reduction <maximumf>, %8, %cst_7 [1] : vector<2x128xf32> to vector<2xf32>
    %10 = vector.shape_cast %9 : vector<2xf32> to vector<2x1xf32>
    %11 = vector.broadcast %10 : vector<2x1xf32> to vector<2x128xf32>
    %12 = arith.subf %8, %11 : vector<2x128xf32>
    %13 = math.exp %12 : vector<2x128xf32>
    %cst_8 = arith.constant dense<0.000000e+00> : vector<2xf32>
    %14 = vector.multi_reduction <add>, %13, %cst_8 [1] : vector<2x128xf32> to vector<2xf32>
    %15 = vector.shape_cast %14 : vector<2xf32> to vector<2x1xf32>
    %cst_9 = arith.constant 1.000000e+00 : f32
    %16 = vector.broadcast %cst_9 : f32 to vector<2x1xf32>
    %17 = arith.divf %16, %15 : vector<2x1xf32>
    %18 = vector.broadcast %17 : vector<2x1xf32> to vector<2x128xf32>
    %19 = arith.mulf %13, %18 : vector<2x128xf32>
    %c1 = arith.constant 1 : index
    %c0_10 = arith.constant 0 : index
    %20 = vector.load %arg4[%c1, %c0_10] : memref<5x128xf32, #tpu.memory_space<vmem>>, vector<1x128xf32>
    %21 = vector.broadcast %20 : vector<1x128xf32> to vector<2x128xf32>
    %22 = arith.addf %5, %21 : vector<2x128xf32>
    %cst_11 = arith.constant dense<0xFF800000> : vector<2xf32>
    %23 = vector.multi_reduction <maximumf>, %22, %cst_11 [1] : vector<2x128xf32> to vector<2xf32>
    %24 = vector.shape_cast %23 : vector<2xf32> to vector<2x1xf32>
    %25 = vector.broadcast %24 : vector<2x1xf32> to vector<2x128xf32>
    %26 = arith.subf %22, %25 : vector<2x128xf32>
    %27 = math.exp %26 : vector<2x128xf32>
    %cst_12 = arith.constant dense<0.000000e+00> : vector<2xf32>
    %28 = vector.multi_reduction <add>, %27, %cst_12 [1] : vector<2x128xf32> to vector<2xf32>
    %29 = vector.shape_cast %28 : vector<2xf32> to vector<2x1xf32>
    %cst_13 = arith.constant 1.000000e+00 : f32
    %30 = vector.broadcast %cst_13 : f32 to vector<2x1xf32>
    %31 = arith.divf %30, %29 : vector<2x1xf32>
    %32 = vector.broadcast %31 : vector<2x1xf32> to vector<2x128xf32>
    %33 = arith.mulf %27, %32 : vector<2x128xf32>
    %34 = arith.addf %19, %33 : vector<2x128xf32>
    %c2 = arith.constant 2 : index
    %c0_14 = arith.constant 0 : index
    %35 = vector.load %arg4[%c2, %c0_14] : memref<5x128xf32, #tpu.memory_space<vmem>>, vector<1x128xf32>
    %36 = vector.broadcast %35 : vector<1x128xf32> to vector<2x128xf32>
    %37 = arith.addf %5, %36 : vector<2x128xf32>
    %cst_15 = arith.constant dense<0xFF800000> : vector<2xf32>
    %38 = vector.multi_reduction <maximumf>, %37, %cst_15 [1] : vector<2x128xf32> to vector<2xf32>
    %39 = vector.shape_cast %38 : vector<2xf32> to vector<2x1xf32>
    %40 = vector.broadcast %39 : vector<2x1xf32> to vector<2x128xf32>
    %41 = arith.subf %37, %40 : vector<2x128xf32>
    %42 = math.exp %41 : vector<2x128xf32>
    %cst_16 = arith.constant dense<0.000000e+00> : vector<2xf32>
    %43 = vector.multi_reduction <add>, %42, %cst_16 [1] : vector<2x128xf32> to vector<2xf32>
    %44 = vector.shape_cast %43 : vector<2xf32> to vector<2x1xf32>
    %cst_17 = arith.constant 1.000000e+00 : f32
    %45 = vector.broadcast %cst_17 : f32 to vector<2x1xf32>
    %46 = arith.divf %45, %44 : vector<2x1xf32>
    %47 = vector.broadcast %46 : vector<2x1xf32> to vector<2x128xf32>
    %48 = arith.mulf %42, %47 : vector<2x128xf32>
    %49 = arith.addf %34, %48 : vector<2x128xf32>
    %c3 = arith.constant 3 : index
    %c0_18 = arith.constant 0 : index
    %50 = vector.load %arg4[%c3, %c0_18] : memref<5x128xf32, #tpu.memory_space<vmem>>, vector<1x128xf32>
    %51 = vector.broadcast %50 : vector<1x128xf32> to vector<2x128xf32>
    %52 = arith.addf %5, %51 : vector<2x128xf32>
    %cst_19 = arith.constant dense<0xFF800000> : vector<2xf32>
    %53 = vector.multi_reduction <maximumf>, %52, %cst_19 [1] : vector<2x128xf32> to vector<2xf32>
    %54 = vector.shape_cast %53 : vector<2xf32> to vector<2x1xf32>
    %55 = vector.broadcast %54 : vector<2x1xf32> to vector<2x128xf32>
    %56 = arith.subf %52, %55 : vector<2x128xf32>
    %57 = math.exp %56 : vector<2x128xf32>
    %cst_20 = arith.constant dense<0.000000e+00> : vector<2xf32>
    %58 = vector.multi_reduction <add>, %57, %cst_20 [1] : vector<2x128xf32> to vector<2xf32>
    %59 = vector.shape_cast %58 : vector<2xf32> to vector<2x1xf32>
    %cst_21 = arith.constant 1.000000e+00 : f32
    %60 = vector.broadcast %cst_21 : f32 to vector<2x1xf32>
    %61 = arith.divf %60, %59 : vector<2x1xf32>
    %62 = vector.broadcast %61 : vector<2x1xf32> to vector<2x128xf32>
    %63 = arith.mulf %57, %62 : vector<2x128xf32>
    %64 = arith.addf %49, %63 : vector<2x128xf32>
    %c4 = arith.constant 4 : index
    %c0_22 = arith.constant 0 : index
    %65 = vector.load %arg4[%c4, %c0_22] : memref<5x128xf32, #tpu.memory_space<vmem>>, vector<1x128xf32>
    %66 = vector.broadcast %65 : vector<1x128xf32> to vector<2x128xf32>
    %67 = arith.addf %5, %66 : vector<2x128xf32>
    %cst_23 = arith.constant dense<0xFF800000> : vector<2xf32>
    %68 = vector.multi_reduction <maximumf>, %67, %cst_23 [1] : vector<2x128xf32> to vector<2xf32>
    %69 = vector.shape_cast %68 : vector<2xf32> to vector<2x1xf32>
    %70 = vector.broadcast %69 : vector<2x1xf32> to vector<2x128xf32>
    %71 = arith.subf %67, %70 : vector<2x128xf32>
    %72 = math.exp %71 : vector<2x128xf32>
    %cst_24 = arith.constant dense<0.000000e+00> : vector<2xf32>
    %73 = vector.multi_reduction <add>, %72, %cst_24 [1] : vector<2x128xf32> to vector<2xf32>
    %74 = vector.shape_cast %73 : vector<2xf32> to vector<2x1xf32>
    %cst_25 = arith.constant 1.000000e+00 : f32
    %75 = vector.broadcast %cst_25 : f32 to vector<2x1xf32>
    %76 = arith.divf %75, %74 : vector<2x1xf32>
    %77 = vector.broadcast %76 : vector<2x1xf32> to vector<2x128xf32>
    %78 = arith.mulf %72, %77 : vector<2x128xf32>
    %79 = arith.addf %64, %78 : vector<2x128xf32>
    %cst_26 = arith.constant 2.000000e-01 : f32
    %80 = vector.broadcast %cst_26 : f32 to vector<2x128xf32>
    %81 = arith.mulf %79, %80 : vector<2x128xf32>
    %c0_27 = arith.constant 0 : index
    %c0_28 = arith.constant 0 : index
    %82 = vector.load %arg5[%c0_27, %c0_28] : memref<2x128xf32, #tpu.memory_space<vmem>>, vector<2x128xf32>
    tpu.vector_store %arg5[%c0_27, %c0_28], %81 {strides = array<i32>} : memref<2x128xf32, #tpu.memory_space<vmem>>, vector<2x128xf32>,
    return
  }
  func.func @transform_0(%arg0: i32) -> (i32, i32) {
    %c0_i32 = arith.constant 0 : i32
    %c0_i32_0 = arith.constant 0 : i32
    return %arg0, %c0_i32 : i32, i32
  }
  func.func @transform_1(%arg0: i32) -> (i32, i32) {
    %c0_i32 = arith.constant 0 : i32
    %c0_i32_0 = arith.constant 0 : i32
    %c0_i32_1 = arith.constant 0 : i32
    return %c0_i32, %c0_i32_0 : i32, i32
  }
  func.func @transform_2(%arg0: i32) -> (i32, i32) {
    %c0_i32 = arith.constant 0 : i32
    %c0_i32_0 = arith.constant 0 : i32
    %c0_i32_1 = arith.constant 0 : i32
    return %c0_i32, %c0_i32_0 : i32, i32
  }
  func.func @transform_3(%arg0: i32) -> (i32, i32) {
    %c0_i32 = arith.constant 0 : i32
    %c0_i32_0 = arith.constant 0 : i32
    %c0_i32_1 = arith.constant 0 : i32
    return %c0_i32, %c0_i32_0 : i32, i32
  }
  func.func @transform_4(%arg0: i32) -> (i32, i32) {
    %c0_i32 = arith.constant 0 : i32
    %c0_i32_0 = arith.constant 0 : i32
    return %arg0, %c0_i32 : i32, i32
  }
}

</mosaic_0001>

<llo_original>
// kernel: tpu_custom_call.1
$region0: #{tpu_custom_call.1}
  #allocation0 [shape = 'u32[]', space=smem, size = 0x4, offset = 0x4, fixed_abs, tag = 'smem constant byte address 0x4 - core index']
  #allocation1 [shape = 'u32[144,128]{1,0:T(1,128)}', space=vmem, size = 0x12000, scoped, tag = 'internal scratch']
  %s0 = inlined_call_operand.hbm [shape: f32[2,3072], index: 0, kind: input, shape index: {}]
  %s1 = inlined_call_operand.hbm [shape: f32[3072,128], index: 1, kind: input, shape index: {}]
  %s2 = inlined_call_operand.hbm [shape: f32[1,128], index: 2, kind: input, shape index: {}]
  %s3 = inlined_call_operand.hbm [shape: f32[5,128], index: 3, kind: input, shape index: {}]
  %s4 = inlined_call_operand.hbm [shape: f32[2,128], index: 4, kind: output, shape index: {}]
  %s5 = sld [smem:[#allocation0]]
  $region42: #{tpu_custom_call.1} parent=0
    _
  %s7 = ssub.s32 1, %s5
  %s8 = scalar_select 0, %s7, %s5
  $region1: #{tpu_custom_call.1} parent=0
    #allocation2 [shape = 'u8[24576]{0}', space=vmem, size = 0x6000, scoped, tag = 'input window, operand 0, single buffered']
    #allocation3 [shape = 's32[1]{0}', space=sflag, size = 0x4, scoped, tag = 'scoped memory for tpu_custom_call.1']
    #allocation4 [shape = 's32[1]{0}', space=sflag, size = 0x4, scoped, tag = 'scoped memory for tpu_custom_call.1']
    #allocation5 [shape = 'u8[1572864]{0}', space=vmem, size = 0x180000, scoped, tag = 'input window, operand 1, single buffered']
    #allocation6 [shape = 's32[1]{0}', space=sflag, size = 0x4, scoped, tag = 'scoped memory for tpu_custom_call.1']
    #allocation7 [shape = 'u8[512]{0}', space=vmem, size = 0x400, scoped, tag = 'input window, operand 2, single buffered']
    #allocation8 [shape = 'u8[4096]{0}', space=vmem, size = 0x1000, scoped, tag = 'input window, operand 3, single buffered']
    #allocation9 [shape = 's32[1]{0}', space=sflag, size = 0x4, scoped, tag = 'scoped memory for tpu_custom_call.1']
    #allocation10 [shape = 'u8[1024]{0}', space=vmem, size = 0x400, scoped, tag = 'output window, operand 0, single buffered']
    %9 = vsyncpa [#allocation3], 0
    %10 = vsyncpa [#allocation6], 0
    %11 = vsyncpa [#allocation9], 0
    %12 = vsyncpa [#allocation4], 0
    // Predicated region
    $region2: #{tpu_custom_call.1} parent=1 // pred_check
      _
    $region3: #{tpu_custom_call.1} parent=1 // pred_check_branch
      %14 = sbr.rel (0) target = $region5
    $region4: #{tpu_custom_call.1} parent=1 // pred_region
      %s16 = ssub.s32 768, 768
      %17 = vsyncadd [#allocation3], %s16
      %s19 = sshll.u32 [#allocation2], 4
      %s20 = int_to_ptr.vmem [resolvable:$true] %s19
      %22 = dma.hbm_to_vmem [thread:$0]  %s0, 768, %s20, [#allocation3]
    $region5: #{tpu_custom_call.1} parent=1 // pred_fallthru
      _
    // Predicated region
    $region6: #{tpu_custom_call.1} parent=1 // pred_check
      _
    $region7: #{tpu_custom_call.1} parent=1 // pred_check_branch
      %24 = sbr.rel (0) target = $region9
    $region8: #{tpu_custom_call.1} parent=1 // pred_region
      %s26 = ssub.s32 49152, 49152
      %27 = vsyncadd [#allocation6], %s26
      %s28 = sshll.u32 [#allocation5], 4
      %s29 = int_to_ptr.vmem [resolvable:$true] %s28
      %34 = dma.hbm_to_vmem [thread:$0]  %s1, 49152, %s29, [#allocation6], 128, 128, 8
    $region9: #{tpu_custom_call.1} parent=1 // pred_fallthru
      _
    // Predicated region
    $region10: #{tpu_custom_call.1} parent=1 // pred_check
      _
    $region11: #{tpu_custom_call.1} parent=1 // pred_check_branch
      %36 = sbr.rel (0) target = $region13
    $region12: #{tpu_custom_call.1} parent=1 // pred_region
      %s38 = ssub.s32 16, 16
      %39 = vsyncadd [#allocation6], %s38
      %s41 = sshll.u32 [#allocation7], 4
      %s42 = int_to_ptr.vmem [resolvable:$true] %s41
      %44 = dma.hbm_to_vmem [thread:$0]  %s2, 16, %s42, [#allocation6]
    $region13: #{tpu_custom_call.1} parent=1 // pred_fallthru
      _
    // Predicated region
    $region14: #{tpu_custom_call.1} parent=1 // pred_check
      _
    $region15: #{tpu_custom_call.1} parent=1 // pred_check_branch
      %46 = sbr.rel (0) target = $region17
    $region16: #{tpu_custom_call.1} parent=1 // pred_region
      %s48 = ssub.s32 128, 128
      %49 = vsyncadd [#allocation9], %s48
      %s51 = sshll.u32 [#allocation8], 4
      %s52 = int_to_ptr.vmem [resolvable:$true] %s51
      %54 = dma.hbm_to_vmem [thread:$0]  %s3, 128, %s52, [#allocation9]
    $region17: #{tpu_custom_call.1} parent=1 // pred_fallthru
      _
    // Predicated region
    $region18: #{tpu_custom_call.1} parent=1 // pred_check
      _
    $region19: #{tpu_custom_call.1} parent=1 // pred_check_branch
      %56 = sbr.rel (0) target = $region21
    $region20: #{tpu_custom_call.1} parent=1 // pred_region
      %57 = dma.done [#allocation3], 768
    $region21: #{tpu_custom_call.1} parent=1 // pred_fallthru
      _
    // Predicated region
    $region22: #{tpu_custom_call.1} parent=1 // pred_check
      _
    $region23: #{tpu_custom_call.1} parent=1 // pred_check_branch
      %59 = sbr.rel (0) target = $region25
    $region24: #{tpu_custom_call.1} parent=1 // pred_region
      %60 = dma.done [#allocation6], 49152
    $region25: #{tpu_custom_call.1} parent=1 // pred_fallthru
      _
    // Predicated region
    $region26: #{tpu_custom_call.1} parent=1 // pred_check
      _
    $region27: #{tpu_custom_call.1} parent=1 // pred_check_branch
      %62 = sbr.rel (0) target = $region29
    $region28: #{tpu_custom_call.1} parent=1 // pred_region
      %63 = dma.done [#allocation6], 16
    $region29: #{tpu_custom_call.1} parent=1 // pred_fallthru
      _
    // Predicated region
    $region30: #{tpu_custom_call.1} parent=1 // pred_check
      _
    $region31: #{tpu_custom_call.1} parent=1 // pred_check_branch
      %65 = sbr.rel (0) target = $region33
    $region32: #{tpu_custom_call.1} parent=1 // pred_region
      %66 = dma.done [#allocation9], 128
    $region33: #{tpu_custom_call.1} parent=1 // pred_fallthru
      _
    %v67 = vld [vmem:[#allocation2] sm:$0xff]
    %v68 = vld [vmem:[#allocation2 + $0x8] sm:$0xff]
    %v69 = vld [vmem:[#allocation2 + $0x10] sm:$0xff]
    %v70 = vld [vmem:[#allocation2 + $0x18] sm:$0xff]
    %v71 = vld [vmem:[#allocation2 + $0x20] sm:$0xff]
    %v72 = vld [vmem:[#allocation2 + $0x28] sm:$0xff]
    %v73 = vld [vmem:[#allocation5] sm:$0xff]
    %v74 = vld [vmem:[#allocation5 + $0x8] sm:$0xff]
    %v75 = vld [vmem:[#allocation5 + $0x10] sm:$0xff]
    %v76 = vld [vmem:[#allocation5 + $0x18] sm:$0xff]
    %v77 = vld [vmem:[#allocation5 + $0x20] sm:$0xff]
    %v78 = vld [vmem:[#allocation5 + $0x28] sm:$0xff]
    %v79 = vld [vmem:[#allocation5 + $0x30] sm:$0xff]
    %v80 = vld [vmem:[#allocation5 + $0x38] sm:$0xff]
    %v81 = vld [vmem:[#allocation5 + $0x40] sm:$0xff]
    %v82 = vld [vmem:[#allocation5 + $0x48] sm:$0xff]
    %v83 = vld [vmem:[#allocation5 + $0x50] sm:$0xff]
    %v84 = vld [vmem:[#allocation5 + $0x58] sm:$0xff]
    %v85 = vld [vmem:[#allocation5 + $0x60] sm:$0xff]
    %v86 = vld [vmem:[#allocation5 + $0x68] sm:$0xff]
    %v87 = vld [vmem:[#allocation5 + $0x70] sm:$0xff]
    %v88 = vld [vmem:[#allocation5 + $0x78] sm:$0xff]
    %v89 = vld [vmem:[#allocation5 + $0x80] sm:$0xff]
    %v90 = vld [vmem:[#allocation5 + $0x88] sm:$0xff]
    %v91 = vld [vmem:[#allocation5 + $0x90] sm:$0xff]
    %v92 = vld [vmem:[#allocation5 + $0x98] sm:$0xff]
    %v93 = vld [vmem:[#allocation5 + $0xa0] sm:$0xff]
    %v94 = vld [vmem:[#allocation5 + $0xa8] sm:$0xff]
    %v95 = vld [vmem:[#allocation5 + $0xb0] sm:$0xff]
    %v96 = vld [vmem:[#allocation5 + $0xb8] sm:$0xff]
    %v97 = vld [vmem:[#allocation5 + $0xc0] sm:$0xff]
    %v98 = vld [vmem:[#allocation5 + $0xc8] sm:$0xff]
    %v99 = vld [vmem:[#allocation5 + $0xd0] sm:$0xff]
    %v100 = vld [vmem:[#allocation5 + $0xd8] sm:$0xff]
    %v101 = vld [vmem:[#allocation5 + $0xe0] sm:$0xff]
    %v102 = vld [vmem:[#allocation5 + $0xe8] sm:$0xff]
    %v103 = vld [vmem:[#allocation5 + $0xf0] sm:$0xff]
    %v104 = vld [vmem:[#allocation5 + $0xf8] sm:$0xff]
    %v105 = vld [vmem:[#allocation5 + $0x100] sm:$0xff]
    %v106 = vld [vmem:[#allocation5 + $0x108] sm:$0xff]
    %v107 = vld [vmem:[#allocation5 + $0x110] sm:$0xff]
    %v108 = vld [vmem:[#allocation5 + $0x118] sm:$0xff]
    %v109 = vld [vmem:[#allocation5 + $0x120] sm:$0xff]
    %v110 = vld [vmem:[#allocation5 + $0x128] sm:$0xff]
    %v111 = vld [vmem:[#allocation5 + $0x130] sm:$0xff]
    %v112 = vld [vmem:[#allocation5 + $0x138] sm:$0xff]
    %v113 = vld [vmem:[#allocation5 + $0x140] sm:$0xff]
    %v114 = vld [vmem:[#allocation5 + $0x148] sm:$0xff]
    %v115 = vld [vmem:[#allocation5 + $0x150] sm:$0xff]
    %v116 = vld [vmem:[#allocation5 + $0x158] sm:$0xff]
    %v117 = vld [vmem:[#allocation5 + $0x160] sm:$0xff]
    %v118 = vld [vmem:[#allocation5 + $0x168] sm:$0xff]
    %v119 = vld [vmem:[#allocation5 + $0x170] sm:$0xff]
    %v120 = vld [vmem:[#allocation5 + $0x178] sm:$0xff]
    %v121 = vld [vmem:[#allocation5 + $0x180] sm:$0xff]
    %v122 = vld [vmem:[#allocation5 + $0x188] sm:$0xff]
    %v123 = vld [vmem:[#allocation5 + $0x190] sm:$0xff]
    %v124 = vld [vmem:[#allocation5 + $0x198] sm:$0xff]
    %v125 = vld [vmem:[#allocation5 + $0x1a0] sm:$0xff]
    %v126 = vld [vmem:[#allocation5 + $0x1a8] sm:$0xff]
    %v127 = vld [vmem:[#allocation5 + $0x1b0] sm:$0xff]
    %v128 = vld [vmem:[#allocation5 + $0x1b8] sm:$0xff]
    %v129 = vld [vmem:[#allocation5 + $0x1c0] sm:$0xff]
    %v130 = vld [vmem:[#allocation5 + $0x1c8] sm:$0xff]
    %v131 = vld [vmem:[#allocation5 + $0x1d0] sm:$0xff]
    %v132 = vld [vmem:[#allocation5 + $0x1d8] sm:$0xff]
    %v133 = vld [vmem:[#allocation5 + $0x1e0] sm:$0xff]
    %v134 = vld [vmem:[#allocation5 + $0x1e8] sm:$0xff]
    %v135 = vld [vmem:[#allocation5 + $0x1f0] sm:$0xff]
    %v136 = vld [vmem:[#allocation5 + $0x1f8] sm:$0xff]
    %v137 = vld [vmem:[#allocation5 + $0x200] sm:$0xff]
    %v138 = vld [vmem:[#allocation5 + $0x208] sm:$0xff]
    %v139 = vld [vmem:[#allocation5 + $0x210] sm:$0xff]
    %v140 = vld [vmem:[#allocation5 + $0x218] sm:$0xff]
    %v141 = vld [vmem:[#allocation5 + $0x220] sm:$0xff]
    %v142 = vld [vmem:[#allocation5 + $0x228] sm:$0xff]
    %v143 = vld [vmem:[#allocation5 + $0x230] sm:$0xff]
    %v144 = vld [vmem:[#allocation5 + $0x238] sm:$0xff]
    %v145 = vld [vmem:[#allocation5 + $0x240] sm:$0xff]
    %v146 = vld [vmem:[#allocation5 + $0x248] sm:$0xff]
    %v147 = vld [vmem:[#allocation5 + $0x250] sm:$0xff]
    %v148 = vld [vmem:[#allocation5 + $0x258] sm:$0xff]
    %v149 = vld [vmem:[#allocation5 + $0x260] sm:$0xff]
    %v150 = vld [vmem:[#allocation5 + $0x268] sm:$0xff]
    %v151 = vld [vmem:[#allocation5 + $0x270] sm:$0xff]
    %v152 = vld [vmem:[#allocation5 + $0x278] sm:$0xff]
    %v153 = vld [vmem:[#allocation5 + $0x280] sm:$0xff]
    %v154 = vld [vmem:[#allocation5 + $0x288] sm:$0xff]
    %v155 = vld [vmem:[#allocation5 + $0x290] sm:$0xff]
    %v156 = vld [vmem:[#allocation5 + $0x298] sm:$0xff]
    %v157 = vld [vmem:[#allocation5 + $0x2a0] sm:$0xff]
    %v158 = vld [vmem:[#allocation5 + $0x2a8] sm:$0xff]
    %v159 = vld [vmem:[#allocation5 + $0x2b0] sm:$0xff]
    %v160 = vld [vmem:[#allocation5 + $0x2b8] sm:$0xff]
    %v161 = vld [vmem:[#allocation5 + $0x2c0] sm:$0xff]
    %v162 = vld [vmem:[#allocation5 + $0x2c8] sm:$0xff]
    %v163 = vld [vmem:[#allocation5 + $0x2d0] sm:$0xff]
    %v164 = vld [vmem:[#allocation5 + $0x2d8] sm:$0xff]
    %v165 = vld [vmem:[#allocation5 + $0x2e0] sm:$0xff]
    %v166 = vld [vmem:[#allocation5 + $0x2e8] sm:$0xff]
    %v167 = vld [vmem:[#allocation5 + $0x2f0] sm:$0xff]
    %v168 = vld [vmem:[#allocation5 + $0x2f8] sm:$0xff]
    %v169 = vld [vmem:[#allocation5 + $0x300] sm:$0xff]
    %v170 = vld [vmem:[#allocation5 + $0x308] sm:$0xff]
    %v171 = vld [vmem:[#allocation5 + $0x310] sm:$0xff]
    %v172 = vld [vmem:[#allocation5 + $0x318] sm:$0xff]
    %v173 = vld [vmem:[#allocation5 + $0x320] sm:$0xff]
    %v174 = vld [vmem:[#allocation5 + $0x328] sm:$0xff]
    %v175 = vld [vmem:[#allocation5 + $0x330] sm:$0xff]
    %v176 = vld [vmem:[#allocation5 + $0x338] sm:$0xff]
    %v177 = vld [vmem:[#allocation5 + $0x340] sm:$0xff]
    %v178 = vld [vmem:[#allocation5 + $0x348] sm:$0xff]
    %v179 = vld [vmem:[#allocation5 + $0x350] sm:$0xff]
    %v180 = vld [vmem:[#allocation5 + $0x358] sm:$0xff]
    %v181 = vld [vmem:[#allocation5 + $0x360] sm:$0xff]
    %v182 = vld [vmem:[#allocation5 + $0x368] sm:$0xff]
    %v183 = vld [vmem:[#allocation5 + $0x370] sm:$0xff]
    %v184 = vld [vmem:[#allocation5 + $0x378] sm:$0xff]
    %v185 = vld [vmem:[#allocation5 + $0x380] sm:$0xff]
    %v186 = vld [vmem:[#allocation5 + $0x388] sm:$0xff]
    %v187 = vld [vmem:[#allocation5 + $0x390] sm:$0xff]
    %v188 = vld [vmem:[#allocation5 + $0x398] sm:$0xff]
    %v189 = vld [vmem:[#allocation5 + $0x3a0] sm:$0xff]
    %v190 = vld [vmem:[#allocation5 + $0x3a8] sm:$0xff]
    %v191 = vld [vmem:[#allocation5 + $0x3b0] sm:$0xff]
    %v192 = vld [vmem:[#allocation5 + $0x3b8] sm:$0xff]
    %v193 = vld [vmem:[#allocation5 + $0x3c0] sm:$0xff]
    %v194 = vld [vmem:[#allocation5 + $0x3c8] sm:$0xff]
    %v195 = vld [vmem:[#allocation5 + $0x3d0] sm:$0xff]
    %v196 = vld [vmem:[#allocation5 + $0x3d8] sm:$0xff]
    %v197 = vld [vmem:[#allocation5 + $0x3e0] sm:$0xff]
    %v198 = vld [vmem:[#allocation5 + $0x3e8] sm:$0xff]
    %v199 = vld [vmem:[#allocation5 + $0x3f0] sm:$0xff]
    %v200 = vld [vmem:[#allocation5 + $0x3f8] sm:$0xff]
    %v201 = vld [vmem:[#allocation5 + $0x400] sm:$0xff]
    %v202 = vld [vmem:[#allocation5 + $0x408] sm:$0xff]
    %v203 = vld [vmem:[#allocation5 + $0x410] sm:$0xff]
    %v204 = vld [vmem:[#allocation5 + $0x418] sm:$0xff]
    %v205 = vld [vmem:[#allocation5 + $0x420] sm:$0xff]
    %v206 = vld [vmem:[#allocation5 + $0x428] sm:$0xff]
    %v207 = vld [vmem:[#allocation5 + $0x430] sm:$0xff]
    %v208 = vld [vmem:[#allocation5 + $0x438] sm:$0xff]
    %v209 = vld [vmem:[#allocation5 + $0x440] sm:$0xff]
    %v210 = vld [vmem:[#allocation5 + $0x448] sm:$0xff]
    %v211 = vld [vmem:[#allocation5 + $0x450] sm:$0xff]
    %v212 = vld [vmem:[#allocation5 + $0x458] sm:$0xff]
    %v213 = vld [vmem:[#allocation5 + $0x460] sm:$0xff]
    %v214 = vld [vmem:[#allocation5 + $0x468] sm:$0xff]
    %v215 = vld [vmem:[#allocation5 + $0x470] sm:$0xff]
    %v216 = vld [vmem:[#allocation5 + $0x478] sm:$0xff]
    %v217 = vld [vmem:[#allocation5 + $0x480] sm:$0xff]
    %v218 = vld [vmem:[#allocation5 + $0x488] sm:$0xff]
    %v219 = vld [vmem:[#allocation5 + $0x490] sm:$0xff]
    %v220 = vld [vmem:[#allocation5 + $0x498] sm:$0xff]
    %v221 = vld [vmem:[#allocation5 + $0x4a0] sm:$0xff]
    %v222 = vld [vmem:[#allocation5 + $0x4a8] sm:$0xff]
    %v223 = vld [vmem:[#allocation5 + $0x4b0] sm:$0xff]
    %v224 = vld [vmem:[#allocation5 + $0x4b8] sm:$0xff]
    %v225 = vld [vmem:[#allocation5 + $0x4c0] sm:$0xff]
    %v226 = vld [vmem:[#allocation5 + $0x4c8] sm:$0xff]
    %v227 = vld [vmem:[#allocation5 + $0x4d0] sm:$0xff]
    %v228 = vld [vmem:[#allocation5 + $0x4d8] sm:$0xff]
    %v229 = vld [vmem:[#allocation5 + $0x4e0] sm:$0xff]
    %v230 = vld [vmem:[#allocation5 + $0x4e8] sm:$0xff]
    %v231 = vld [vmem:[#allocation5 + $0x4f0] sm:$0xff]
    %v232 = vld [vmem:[#allocation5 + $0x4f8] sm:$0xff]
    %v233 = vld [vmem:[#allocation5 + $0x500] sm:$0xff]
    %v234 = vld [vmem:[#allocation5 + $0x508] sm:$0xff]
    %v235 = vld [vmem:[#allocation5 + $0x510] sm:$0xff]
    %v236 = vld [vmem:[#allocation5 + $0x518] sm:$0xff]
    %v237 = vld [vmem:[#allocation5 + $0x520] sm:$0xff]
    %v238 = vld [vmem:[#allocation5 + $0x528] sm:$0xff]
    %v239 = vld [vmem:[#allocation5 + $0x530] sm:$0xff]
    %v240 = vld [vmem:[#allocation5 + $0x538] sm:$0xff]
    %v241 = vld [vmem:[#allocation5 + $0x540] sm:$0xff]
    %v242 = vld [vmem:[#allocation5 + $0x548] sm:$0xff]
    %v243 = vld [vmem:[#allocation5 + $0x550] sm:$0xff]
    %v244 = vld [vmem:[#allocation5 + $0x558] sm:$0xff]
    %v245 = vld [vmem:[#allocation5 + $0x560] sm:$0xff]
    %v246 = vld [vmem:[#allocation5 + $0x568] sm:$0xff]
    %v247 = vld [vmem:[#allocation5 + $0x570] sm:$0xff]
    %v248 = vld [vmem:[#allocation5 + $0x578] sm:$0xff]
    %v249 = vld [vmem:[#allocation5 + $0x580] sm:$0xff]
    %v250 = vld [vmem:[#allocation5 + $0x588] sm:$0xff]
    %v251 = vld [vmem:[#allocation5 + $0x590] sm:$0xff]
    %v252 = vld [vmem:[#allocation5 + $0x598] sm:$0xff]
    %v253 = vld [vmem:[#allocation5 + $0x5a0] sm:$0xff]
    %v254 = vld [vmem:[#allocation5 + $0x5a8] sm:$0xff]
    %v255 = vld [vmem:[#allocation5 + $0x5b0] sm:$0xff]
    %v256 = vld [vmem:[#allocation5 + $0x5b8] sm:$0xff]
    %v257 = vld [vmem:[#allocation5 + $0x5c0] sm:$0xff]
    %v258 = vld [vmem:[#allocation5 + $0x5c8] sm:$0xff]
    %v259 = vld [vmem:[#allocation5 + $0x5d0] sm:$0xff]
    %v260 = vld [vmem:[#allocation5 + $0x5d8] sm:$0xff]
    %v261 = vld [vmem:[#allocation5 + $0x5e0] sm:$0xff]
    %v262 = vld [vmem:[#allocation5 + $0x5e8] sm:$0xff]
    %v263 = vld [vmem:[#allocation5 + $0x5f0] sm:$0xff]
    %v264 = vld [vmem:[#allocation5 + $0x5f8] sm:$0xff]
    %v265 = vld [vmem:[#allocation5 + $0x600] sm:$0xff]
    %v266 = vld [vmem:[#allocation5 + $0x608] sm:$0xff]
    %v267 = vld [vmem:[#allocation5 + $0x610] sm:$0xff]
    %v268 = vld [vmem:[#allocation5 + $0x618] sm:$0xff]
    %v269 = vld [vmem:[#allocation5 + $0x620] sm:$0xff]
    %v270 = vld [vmem:[#allocation5 + $0x628] sm:$0xff]
    %v271 = vld [vmem:[#allocation5 + $0x630] sm:$0xff]
    %v272 = vld [vmem:[#allocation5 + $0x638] sm:$0xff]
    %v273 = vld [vmem:[#allocation5 + $0x640] sm:$0xff]
    %v274 = vld [vmem:[#allocation5 + $0x648] sm:$0xff]
    %v275 = vld [vmem:[#allocation5 + $0x650] sm:$0xff]
    %v276 = vld [vmem:[#allocation5 + $0x658] sm:$0xff]
    %v277 = vld [vmem:[#allocation5 + $0x660] sm:$0xff]
    %v278 = vld [vmem:[#allocation5 + $0x668] sm:$0xff]
    %v279 = vld [vmem:[#allocation5 + $0x670] sm:$0xff]
    %v280 = vld [vmem:[#allocation5 + $0x678] sm:$0xff]
    %v281 = vld [vmem:[#allocation5 + $0x680] sm:$0xff]
    %v282 = vld [vmem:[#allocation5 + $0x688] sm:$0xff]
    %v283 = vld [vmem:[#allocation5 + $0x690] sm:$0xff]
    %v284 = vld [vmem:[#allocation5 + $0x698] sm:$0xff]
    %v285 = vld [vmem:[#allocation5 + $0x6a0] sm:$0xff]
    %v286 = vld [vmem:[#allocation5 + $0x6a8] sm:$0xff]
    %v287 = vld [vmem:[#allocation5 + $0x6b0] sm:$0xff]
    %v288 = vld [vmem:[#allocation5 + $0x6b8] sm:$0xff]
    %v289 = vld [vmem:[#allocation5 + $0x6c0] sm:$0xff]
    %v290 = vld [vmem:[#allocation5 + $0x6c8] sm:$0xff]
    %v291 = vld [vmem:[#allocation5 + $0x6d0] sm:$0xff]
    %v292 = vld [vmem:[#allocation5 + $0x6d8] sm:$0xff]
    %v293 = vld [vmem:[#allocation5 + $0x6e0] sm:$0xff]
    %v294 = vld [vmem:[#allocation5 + $0x6e8] sm:$0xff]
    %v295 = vld [vmem:[#allocation5 + $0x6f0] sm:$0xff]
    %v296 = vld [vmem:[#allocation5 + $0x6f8] sm:$0xff]
    %v297 = vld [vmem:[#allocation5 + $0x700] sm:$0xff]
    %v298 = vld [vmem:[#allocation5 + $0x708] sm:$0xff]
    %v299 = vld [vmem:[#allocation5 + $0x710] sm:$0xff]
    %v300 = vld [vmem:[#allocation5 + $0x718] sm:$0xff]
    %v301 = vld [vmem:[#allocation5 + $0x720] sm:$0xff]
    %v302 = vld [vmem:[#allocation5 + $0x728] sm:$0xff]
    %v303 = vld [vmem:[#allocation5 + $0x730] sm:$0xff]
    %v304 = vld [vmem:[#allocation5 + $0x738] sm:$0xff]
    %v305 = vld [vmem:[#allocation5 + $0x740] sm:$0xff]
    %v306 = vld [vmem:[#allocation5 + $0x748] sm:$0xff]
    %v307 = vld [vmem:[#allocation5 + $0x750] sm:$0xff]
    %v308 = vld [vmem:[#allocation5 + $0x758] sm:$0xff]
    %v309 = vld [vmem:[#allocation5 + $0x760] sm:$0xff]
    %v310 = vld [vmem:[#allocation5 + $0x768] sm:$0xff]
    %v311 = vld [vmem:[#allocation5 + $0x770] sm:$0xff]
    %v312 = vld [vmem:[#allocation5 + $0x778] sm:$0xff]
    %v313 = vld [vmem:[#allocation5 + $0x780] sm:$0xff]
    %v314 = vld [vmem:[#allocation5 + $0x788] sm:$0xff]
    %v315 = vld [vmem:[#allocation5 + $0x790] sm:$0xff]
    %v316 = vld [vmem:[#allocation5 + $0x798] sm:$0xff]
    %v317 = vld [vmem:[#allocation5 + $0x7a0] sm:$0xff]
    %v318 = vld [vmem:[#allocation5 + $0x7a8] sm:$0xff]
    %v319 = vld [vmem:[#allocation5 + $0x7b0] sm:$0xff]
    %v320 = vld [vmem:[#allocation5 + $0x7b8] sm:$0xff]
    %v321 = vld [vmem:[#allocation5 + $0x7c0] sm:$0xff]
    %v322 = vld [vmem:[#allocation5 + $0x7c8] sm:$0xff]
    %v323 = vld [vmem:[#allocation5 + $0x7d0] sm:$0xff]
    %v324 = vld [vmem:[#allocation5 + $0x7d8] sm:$0xff]
    %v325 = vld [vmem:[#allocation5 + $0x7e0] sm:$0xff]
    %v326 = vld [vmem:[#allocation5 + $0x7e8] sm:$0xff]
    %v327 = vld [vmem:[#allocation5 + $0x7f0] sm:$0xff]
    %v328 = vld [vmem:[#allocation5 + $0x7f8] sm:$0xff]
    %v329 = vld [vmem:[#allocation5 + $0x800] sm:$0xff]
    %v330 = vld [vmem:[#allocation5 + $0x808] sm:$0xff]
    %v331 = vld [vmem:[#allocation5 + $0x810] sm:$0xff]
    %v332 = vld [vmem:[#allocation5 + $0x818] sm:$0xff]
    %v333 = vld [vmem:[#allocation5 + $0x820] sm:$0xff]
    %v334 = vld [vmem:[#allocation5 + $0x828] sm:$0xff]
    %v335 = vld [vmem:[#allocation5 + $0x830] sm:$0xff]
    %v336 = vld [vmem:[#allocation5 + $0x838] sm:$0xff]
    %v337 = vld [vmem:[#allocation5 + $0x840] sm:$0xff]
    %v338 = vld [vmem:[#allocation5 + $0x848] sm:$0xff]
    %v339 = vld [vmem:[#allocation5 + $0x850] sm:$0xff]
    %v340 = vld [vmem:[#allocation5 + $0x858] sm:$0xff]
    %v341 = vld [vmem:[#allocation5 + $0x860] sm:$0xff]
    %v342 = vld [vmem:[#allocation5 + $0x868] sm:$0xff]
    %v343 = vld [vmem:[#allocation5 + $0x870] sm:$0xff]
    %v344 = vld [vmem:[#allocation5 + $0x878] sm:$0xff]
    %v345 = vld [vmem:[#allocation5 + $0x880] sm:$0xff]
    %v346 = vld [vmem:[#allocation5 + $0x888] sm:$0xff]
    %v347 = vld [vmem:[#allocation5 + $0x890] sm:$0xff]
    %v348 = vld [vmem:[#allocation5 + $0x898] sm:$0xff]
    %v349 = vld [vmem:[#allocation5 + $0x8a0] sm:$0xff]
    %v350 = vld [vmem:[#allocation5 + $0x8a8] sm:$0xff]
    %v351 = vld [vmem:[#allocation5 + $0x8b0] sm:$0xff]
    %v352 = vld [vmem:[#allocation5 + $0x8b8] sm:$0xff]
    %v353 = vld [vmem:[#allocation5 + $0x8c0] sm:$0xff]
    %v354 = vld [vmem:[#allocation5 + $0x8c8] sm:$0xff]
    %v355 = vld [vmem:[#allocation5 + $0x8d0] sm:$0xff]
    %v356 = vld [vmem:[#allocation5 + $0x8d8] sm:$0xff]
    %v357 = vld [vmem:[#allocation5 + $0x8e0] sm:$0xff]
    %v358 = vld [vmem:[#allocation5 + $0x8e8] sm:$0xff]
    %v359 = vld [vmem:[#allocation5 + $0x8f0] sm:$0xff]
    %v360 = vld [vmem:[#allocation5 + $0x8f8] sm:$0xff]
    %v361 = vld [vmem:[#allocation5 + $0x900] sm:$0xff]
    %v362 = vld [vmem:[#allocation5 + $0x908] sm:$0xff]
    %v363 = vld [vmem:[#allocation5 + $0x910] sm:$0xff]
    %v364 = vld [vmem:[#allocation5 + $0x918] sm:$0xff]
    %v365 = vld [vmem:[#allocation5 + $0x920] sm:$0xff]
    %v366 = vld [vmem:[#allocation5 + $0x928] sm:$0xff]
    %v367 = vld [vmem:[#allocation5 + $0x930] sm:$0xff]
    %v368 = vld [vmem:[#allocation5 + $0x938] sm:$0xff]
    %v369 = vld [vmem:[#allocation5 + $0x940] sm:$0xff]
    %v370 = vld [vmem:[#allocation5 + $0x948] sm:$0xff]
    %v371 = vld [vmem:[#allocation5 + $0x950] sm:$0xff]
    %v372 = vld [vmem:[#allocation5 + $0x958] sm:$0xff]
    %v373 = vld [vmem:[#allocation5 + $0x960] sm:$0xff]
    %v374 = vld [vmem:[#allocation5 + $0x968] sm:$0xff]
    %v375 = vld [vmem:[#allocation5 + $0x970] sm:$0xff]
    %v376 = vld [vmem:[#allocation5 + $0x978] sm:$0xff]
    %v377 = vld [vmem:[#allocation5 + $0x980] sm:$0xff]
    %v378 = vld [vmem:[#allocation5 + $0x988] sm:$0xff]
    %v379 = vld [vmem:[#allocation5 + $0x990] sm:$0xff]
    %v380 = vld [vmem:[#allocation5 + $0x998] sm:$0xff]
    %v381 = vld [vmem:[#allocation5 + $0x9a0] sm:$0xff]
    %v382 = vld [vmem:[#allocation5 + $0x9a8] sm:$0xff]
    %v383 = vld [vmem:[#allocation5 + $0x9b0] sm:$0xff]
    %v384 = vld [vmem:[#allocation5 + $0x9b8] sm:$0xff]
    %v385 = vld [vmem:[#allocation5 + $0x9c0] sm:$0xff]
    %v386 = vld [vmem:[#allocation5 + $0x9c8] sm:$0xff]
    %v387 = vld [vmem:[#allocation5 + $0x9d0] sm:$0xff]
    %v388 = vld [vmem:[#allocation5 + $0x9d8] sm:$0xff]
    %v389 = vld [vmem:[#allocation5 + $0x9e0] sm:$0xff]
    %v390 = vld [vmem:[#allocation5 + $0x9e8] sm:$0xff]
    %v391 = vld [vmem:[#allocation5 + $0x9f0] sm:$0xff]
    %v392 = vld [vmem:[#allocation5 + $0x9f8] sm:$0xff]
    %v393 = vld [vmem:[#allocation5 + $0xa00] sm:$0xff]
    %v394 = vld [vmem:[#allocation5 + $0xa08] sm:$0xff]
    %v395 = vld [vmem:[#allocation5 + $0xa10] sm:$0xff]
    %v396 = vld [vmem:[#allocation5 + $0xa18] sm:$0xff]
    %v397 = vld [vmem:[#allocation5 + $0xa20] sm:$0xff]
    %v398 = vld [vmem:[#allocation5 + $0xa28] sm:$0xff]
    %v399 = vld [vmem:[#allocation5 + $0xa30] sm:$0xff]
    %v400 = vld [vmem:[#allocation5 + $0xa38] sm:$0xff]
    %v401 = vld [vmem:[#allocation5 + $0xa40] sm:$0xff]
    %v402 = vld [vmem:[#allocation5 + $0xa48] sm:$0xff]
    %v403 = vld [vmem:[#allocation5 + $0xa50] sm:$0xff]
    %v404 = vld [vmem:[#allocation5 + $0xa58] sm:$0xff]
    %v405 = vld [vmem:[#allocation5 + $0xa60] sm:$0xff]
    %v406 = vld [vmem:[#allocation5 + $0xa68] sm:$0xff]
    %v407 = vld [vmem:[#allocation5 + $0xa70] sm:$0xff]
    %v408 = vld [vmem:[#allocation5 + $0xa78] sm:$0xff]
    %v409 = vld [vmem:[#allocation5 + $0xa80] sm:$0xff]
    %v410 = vld [vmem:[#allocation5 + $0xa88] sm:$0xff]
    %v411 = vld [vmem:[#allocation5 + $0xa90] sm:$0xff]
    %v412 = vld [vmem:[#allocation5 + $0xa98] sm:$0xff]
    %v413 = vld [vmem:[#allocation5 + $0xaa0] sm:$0xff]
    %v414 = vld [vmem:[#allocation5 + $0xaa8] sm:$0xff]
    %v415 = vld [vmem:[#allocation5 + $0xab0] sm:$0xff]
    %v416 = vld [vmem:[#allocation5 + $0xab8] sm:$0xff]
    %v417 = vld [vmem:[#allocation5 + $0xac0] sm:$0xff]
    %v418 = vld [vmem:[#allocation5 + $0xac8] sm:$0xff]
    %v419 = vld [vmem:[#allocation5 + $0xad0] sm:$0xff]
    %v420 = vld [vmem:[#allocation5 + $0xad8] sm:$0xff]
    %v421 = vld [vmem:[#allocation5 + $0xae0] sm:$0xff]
    %v422 = vld [vmem:[#allocation5 + $0xae8] sm:$0xff]
    %v423 = vld [vmem:[#allocation5 + $0xaf0] sm:$0xff]
    %v424 = vld [vmem:[#allocation5 + $0xaf8] sm:$0xff]
    %v425 = vld [vmem:[#allocation5 + $0xb00] sm:$0xff]
    %v426 = vld [vmem:[#allocation5 + $0xb08] sm:$0xff]
    %v427 = vld [vmem:[#allocation5 + $0xb10] sm:$0xff]
    %v428 = vld [vmem:[#allocation5 + $0xb18] sm:$0xff]
    %v429 = vld [vmem:[#allocation5 + $0xb20] sm:$0xff]
    %v430 = vld [vmem:[#allocation5 + $0xb28] sm:$0xff]
    %v431 = vld [vmem:[#allocation5 + $0xb30] sm:$0xff]
    %v432 = vld [vmem:[#allocation5 + $0xb38] sm:$0xff]
    %v433 = vld [vmem:[#allocation5 + $0xb40] sm:$0xff]
    %v434 = vld [vmem:[#allocation5 + $0xb48] sm:$0xff]
    %v435 = vld [vmem:[#allocation5 + $0xb50] sm:$0xff]
    %v436 = vld [vmem:[#allocation5 + $0xb58] sm:$0xff]
    %v437 = vld [vmem:[#allocation5 + $0xb60] sm:$0xff]
    %v438 = vld [vmem:[#allocation5 + $0xb68] sm:$0xff]
    %v439 = vld [vmem:[#allocation5 + $0xb70] sm:$0xff]
    %v440 = vld [vmem:[#allocation5 + $0xb78] sm:$0xff]
    %v441 = vld [vmem:[#allocation5 + $0xb80] sm:$0xff]
    %v442 = vld [vmem:[#allocation5 + $0xb88] sm:$0xff]
    %v443 = vld [vmem:[#allocation5 + $0xb90] sm:$0xff]
    %v444 = vld [vmem:[#allocation5 + $0xb98] sm:$0xff]
    %v445 = vld [vmem:[#allocation5 + $0xba0] sm:$0xff]
    %v446 = vld [vmem:[#allocation5 + $0xba8] sm:$0xff]
    %v447 = vld [vmem:[#allocation5 + $0xbb0] sm:$0xff]
    %v448 = vld [vmem:[#allocation5 + $0xbb8] sm:$0xff]
    %v449 = vld [vmem:[#allocation5 + $0xbc0] sm:$0xff]
    %v450 = vld [vmem:[#allocation5 + $0xbc8] sm:$0xff]
    %v451 = vld [vmem:[#allocation5 + $0xbd0] sm:$0xff]
    %v452 = vld [vmem:[#allocation5 + $0xbd8] sm:$0xff]
    %v453 = vld [vmem:[#allocation5 + $0xbe0] sm:$0xff]
    %v454 = vld [vmem:[#allocation5 + $0xbe8] sm:$0xff]
    %v455 = vld [vmem:[#allocation5 + $0xbf0] sm:$0xff]
    %v456 = vld [vmem:[#allocation5 + $0xbf8] sm:$0xff]
    %v457 = vld [vmem:[#allocation7] sm:$0x1]
    %v459 = vlaneseq
    %v460 = vshrl.u32 %v459, 7
    %v461 = vsub.s32 0, %v460
    %v462 = vrot.slane %v457, %v461
    %v470 = vcombine.high %v67, %v67
    %v472 = vunpack.c.l.s4 1983009808
    %v473 = vunpack.c.0.s8 %v472
    %v474 = vlaneseq
    %v475 = vshrl.u32 %v474, 7
    %v476 = vsub.s32 %v473, %v475
    %v477 = vrot.slane %v67, %v476
    %v479 = vunpack.c.l.s4 1983009808
    %v480 = vunpack.c.0.s8 %v479
    %v481 = vlaneseq
    %v482 = vshrl.u32 %v481, 7
    %v483 = vsub.s32 %v480, %v482
    %v484 = vrot.slane %v470, %v483
    %v485 = vcombine.high %v477, %v477
    %v486 = vcombine.high %v484, %v484
    %v487 = vcombine.high %v68, %v68
    %v489 = vunpack.c.l.s4 1983009808
    %v490 = vunpack.c.0.s8 %v489
    %v491 = vlaneseq
    %v492 = vshrl.u32 %v491, 7
    %v493 = vsub.s32 %v490, %v492
    %v494 = vrot.slane %v68, %v493
    %v496 = vunpack.c.l.s4 1983009808
    %v497 = vunpack.c.0.s8 %v496
    %v498 = vlaneseq
    %v499 = vshrl.u32 %v498, 7
    %v500 = vsub.s32 %v497, %v499
    %v501 = vrot.slane %v487, %v500
    %v502 = vcombine.high %v494, %v494
    %v503 = vcombine.high %v501, %v501
    %v504 = vcombine.high %v69, %v69
    %v506 = vunpack.c.l.s4 1983009808
    %v507 = vunpack.c.0.s8 %v506
    %v508 = vlaneseq
    %v509 = vshrl.u32 %v508, 7
    %v510 = vsub.s32 %v507, %v509
    %v511 = vrot.slane %v69, %v510
    %v513 = vunpack.c.l.s4 1983009808
    %v514 = vunpack.c.0.s8 %v513
    %v515 = vlaneseq
    %v516 = vshrl.u32 %v515, 7
    %v517 = vsub.s32 %v514, %v516
    %v518 = vrot.slane %v504, %v517
    %v519 = vcombine.high %v511, %v511
    %v520 = vcombine.high %v518, %v518
    %v521 = vcombine.high %v70, %v70
    %v523 = vunpack.c.l.s4 1983009808
    %v524 = vunpack.c.0.s8 %v523
    %v525 = vlaneseq
    %v526 = vshrl.u32 %v525, 7
    %v527 = vsub.s32 %v524, %v526
    %v528 = vrot.slane %v70, %v527
    %v530 = vunpack.c.l.s4 1983009808
    %v531 = vunpack.c.0.s8 %v530
    %v532 = vlaneseq
    %v533 = vshrl.u32 %v532, 7
    %v534 = vsub.s32 %v531, %v533
    %v535 = vrot.slane %v521, %v534
    %v536 = vcombine.high %v528, %v528
    %v537 = vcombine.high %v535, %v535
    %v538 = vcombine.high %v71, %v71
    %v540 = vunpack.c.l.s4 1983009808
    %v541 = vunpack.c.0.s8 %v540
    %v542 = vlaneseq
    %v543 = vshrl.u32 %v542, 7
    %v544 = vsub.s32 %v541, %v543
    %v545 = vrot.slane %v71, %v544
    %v547 = vunpack.c.l.s4 1983009808
    %v548 = vunpack.c.0.s8 %v547
    %v549 = vlaneseq
    %v550 = vshrl.u32 %v549, 7
    %v551 = vsub.s32 %v548, %v550
    %v552 = vrot.slane %v538, %v551
    %v553 = vcombine.high %v545, %v545
    %v554 = vcombine.high %v552, %v552
    %v555 = vcombine.high %v72, %v72
    %v557 = vunpack.c.l.s4 1983009808
    %v558 = vunpack.c.0.s8 %v557
    %v559 = vlaneseq
    %v560 = vshrl.u32 %v559, 7
    %v561 = vsub.s32 %v558, %v560
    %v562 = vrot.slane %v72, %v561
    %v564 = vunpack.c.l.s4 1983009808
    %v565 = vunpack.c.0.s8 %v564
    %v566 = vlaneseq
    %v567 = vshrl.u32 %v566, 7
    %v568 = vsub.s32 %v565, %v567
    %v569 = vrot.slane %v555, %v568
    %v570 = vcombine.high %v562, %v562
    %v571 = vcombine.high %v569, %v569
    %596 = vmatprep.subr.mxu0 0.0
    %597 = vmatpush1.msra.mxu0 %v73
    %598 = vmatprep.subr.mxu0 0.0
    %599 = vmatpush1.msra.mxu0 %v74
    %600 = vmatprep.subr.mxu0 0.0
    %601 = vmatpush1.msra.mxu0 %v75
    %602 = vmatprep.subr.mxu0 0.0
    %603 = vmatpush1.msra.mxu0 %v76
    %604 = vmatprep.subr.mxu0 0.0
    %605 = vmatpush1.msra.mxu0 %v77
    %606 = vmatprep.subr.mxu0 0.0
    %607 = vmatpush1.msra.mxu0 %v78
    %608 = vmatprep.subr.mxu0 0.0
    %609 = vmatpush1.msra.mxu0 %v79
    %610 = vmatprep.subr.mxu0 0.0
    %611 = vmatpush1.msra.mxu0 %v80
    %612 = vmatprep.subr.mxu0 0.0
    %613 = vmatpush1.msra.mxu0 %v81
    %614 = vmatprep.subr.mxu0 0.0
    %615 = vmatpush1.msra.mxu0 %v82
    %616 = vmatprep.subr.mxu0 0.0
    %617 = vmatpush1.msra.mxu0 %v83
    %618 = vmatprep.subr.mxu0 0.0
    %619 = vmatpush1.msra.mxu0 %v84
    %620 = vmatprep.subr.mxu0 0.0
    %621 = vmatpush1.msra.mxu0 %v85
    %622 = vmatprep.subr.mxu0 0.0
    %623 = vmatpush1.msra.mxu0 %v86
    %624 = vmatprep.subr.mxu0 0.0
    %625 = vmatpush1.msra.mxu0 %v87
    %626 = vmatprep.subr.mxu0 0.0
    %627 = vmatpush1.msra.mxu0 %v88
    %628 = vmatprep.subr.mxu0 0.0
    %629 = vmatpush1.msra.mxu0 %v89
    %630 = vmatprep.subr.mxu0 0.0
    %631 = vmatpush1.msra.mxu0 %v90
    %632 = vmatprep.subr.mxu0 0.0
    %633 = vmatpush1.msra.mxu0 %v91
    %634 = vmatprep.subr.mxu0 0.0
    %635 = vmatpush1.msra.mxu0 %v92
    %636 = vmatprep.subr.mxu0 0.0
    %637 = vmatpush1.msra.mxu0 %v93
    %638 = vmatprep.subr.mxu0 0.0
    %639 = vmatpush1.msra.mxu0 %v94
    %640 = vmatprep.subr.mxu0 0.0
    %641 = vmatpush1.msra.mxu0 %v95
    %642 = vmatprep.subr.mxu0 0.0
    %643 = vmatpush1.msra.mxu0 %v96
    %644 = vmatprep.subr.mxu0 0.0
    %645 = vmatpush1.msra.mxu0 %v97
    %646 = vmatprep.subr.mxu0 0.0
    %647 = vmatpush1.msra.mxu0 %v98
    %648 = vmatprep.subr.mxu0 0.0
    %649 = vmatpush1.msra.mxu0 %v99
    %650 = vmatprep.subr.mxu0 0.0
    %651 = vmatpush1.msra.mxu0 %v100
    %652 = vmatprep.subr.mxu0 0.0
    %653 = vmatpush1.msra.mxu0 %v101
    %654 = vmatprep.subr.mxu0 0.0
    %655 = vmatpush1.msra.mxu0 %v102
    %656 = vmatprep.subr.mxu0 0.0
    %657 = vmatpush1.msra.mxu0 %v103
    %658 = vmatprep.subr.mxu0 0.0
    %659 = vmatpush1.msra.mxu0 %v104
    %660 = vmatprep.mubr.f32.mxu0 %v485
    %661 = vmatmul.mubr.f32.gmra.mrb[0].mxu0 %v477
    %v662 = vpop.f32.mrb[0].mxu0
    %v663 = vadd.f32 %v462, %v662
    %v664 = vpop.f32.mrb[0].mxu0
    %665 = vdwg.mxu0
    %666 = vmatprep.subr.mxu0 0.0
    %667 = vmatpush1.msra.mxu0 %v105
    %668 = vmatprep.subr.mxu0 0.0
    %669 = vmatpush1.msra.mxu0 %v106
    %670 = vmatprep.subr.mxu0 0.0
    %671 = vmatpush1.msra.mxu0 %v107
    %672 = vmatprep.subr.mxu0 0.0
    %673 = vmatpush1.msra.mxu0 %v108
    %674 = vmatprep.subr.mxu0 0.0
    %675 = vmatpush1.msra.mxu0 %v109
    %676 = vmatprep.subr.mxu0 0.0
    %677 = vmatpush1.msra.mxu0 %v110
    %678 = vmatprep.subr.mxu0 0.0
    %679 = vmatpush1.msra.mxu0 %v111
    %680 = vmatprep.subr.mxu0 0.0
    %681 = vmatpush1.msra.mxu0 %v112
    %682 = vmatprep.subr.mxu0 0.0
    %683 = vmatpush1.msra.mxu0 %v113
    %684 = vmatprep.subr.mxu0 0.0
    %685 = vmatpush1.msra.mxu0 %v114
    %686 = vmatprep.subr.mxu0 0.0
    %687 = vmatpush1.msra.mxu0 %v115
    %688 = vmatprep.subr.mxu0 0.0
    %689 = vmatpush1.msra.mxu0 %v116
    %690 = vmatprep.subr.mxu0 0.0
    %691 = vmatpush1.msra.mxu0 %v117
    %692 = vmatprep.subr.mxu0 0.0
    %693 = vmatpush1.msra.mxu0 %v118
    %694 = vmatprep.subr.mxu0 0.0
    %695 = vmatpush1.msra.mxu0 %v119
    %696 = vmatprep.subr.mxu0 0.0
    %697 = vmatpush1.msra.mxu0 %v120
    %698 = vmatprep.subr.mxu0 0.0
    %699 = vmatpush1.msra.mxu0 %v121
    %700 = vmatprep.subr.mxu0 0.0
    %701 = vmatpush1.msra.mxu0 %v122
    %702 = vmatprep.subr.mxu0 0.0
    %703 = vmatpush1.msra.mxu0 %v123
    %704 = vmatprep.subr.mxu0 0.0
    %705 = vmatpush1.msra.mxu0 %v124
    %706 = vmatprep.subr.mxu0 0.0
    %707 = vmatpush1.msra.mxu0 %v125
    %708 = vmatprep.subr.mxu0 0.0
    %709 = vmatpush1.msra.mxu0 %v126
    %710 = vmatprep.subr.mxu0 0.0
    %711 = vmatpush1.msra.mxu0 %v127
    %712 = vmatprep.subr.mxu0 0.0
    %713 = vmatpush1.msra.mxu0 %v128
    %714 = vmatprep.subr.mxu0 0.0
    %715 = vmatpush1.msra.mxu0 %v129
    %716 = vmatprep.subr.mxu0 0.0
    %717 = vmatpush1.msra.mxu0 %v130
    %718 = vmatprep.subr.mxu0 0.0
    %719 = vmatpush1.msra.mxu0 %v131
    %720 = vmatprep.subr.mxu0 0.0
    %721 = vmatpush1.msra.mxu0 %v132
    %722 = vmatprep.subr.mxu0 0.0
    %723 = vmatpush1.msra.mxu0 %v133
    %724 = vmatprep.subr.mxu0 0.0
    %725 = vmatpush1.msra.mxu0 %v134
    %726 = vmatprep.subr.mxu0 0.0
    %727 = vmatpush1.msra.mxu0 %v135
    %728 = vmatprep.subr.mxu0 0.0
    %729 = vmatpush1.msra.mxu0 %v136
    %730 = vmatprep.mubr.f32.mxu0 %v486
    %731 = vmatmul.mubr.f32.gmra.mrb[0].mxu0 %v484
    %v732 = vpop.f32.mrb[0].mxu0
    %v733 = vadd.f32 %v663, %v732
    %v734 = vpop.f32.mrb[0].mxu0
    %735 = vdwg.mxu0
    %736 = vmatprep.subr.mxu0 0.0
    %737 = vmatpush1.msra.mxu0 %v137
    %738 = vmatprep.subr.mxu0 0.0
    %739 = vmatpush1.msra.mxu0 %v138
    %740 = vmatprep.subr.mxu0 0.0
    %741 = vmatpush1.msra.mxu0 %v139
    %742 = vmatprep.subr.mxu0 0.0
    %743 = vmatpush1.msra.mxu0 %v140
    %744 = vmatprep.subr.mxu0 0.0
    %745 = vmatpush1.msra.mxu0 %v141
    %746 = vmatprep.subr.mxu0 0.0
    %747 = vmatpush1.msra.mxu0 %v142
    %748 = vmatprep.subr.mxu0 0.0
    %749 = vmatpush1.msra.mxu0 %v143
    %750 = vmatprep.subr.mxu0 0.0
    %751 = vmatpush1.msra.mxu0 %v144
    %752 = vmatprep.subr.mxu0 0.0
    %753 = vmatpush1.msra.mxu0 %v145
    %754 = vmatprep.subr.mxu0 0.0
    %755 = vmatpush1.msra.mxu0 %v146
    %756 = vmatprep.subr.mxu0 0.0
    %757 = vmatpush1.msra.mxu0 %v147
    %758 = vmatprep.subr.mxu0 0.0
    %759 = vmatpush1.msra.mxu0 %v148
    %760 = vmatprep.subr.mxu0 0.0
    %761 = vmatpush1.msra.mxu0 %v149
    %762 = vmatprep.subr.mxu0 0.0
    %763 = vmatpush1.msra.mxu0 %v150
    %764 = vmatprep.subr.mxu0 0.0
    %765 = vmatpush1.msra.mxu0 %v151
    %766 = vmatprep.subr.mxu0 0.0
    %767 = vmatpush1.msra.mxu0 %v152
    %768 = vmatprep.subr.mxu0 0.0
    %769 = vmatpush1.msra.mxu0 %v153
    %770 = vmatprep.subr.mxu0 0.0
    %771 = vmatpush1.msra.mxu0 %v154
    %772 = vmatprep.subr.mxu0 0.0
    %773 = vmatpush1.msra.mxu0 %v155
    %774 = vmatprep.subr.mxu0 0.0
    %775 = vmatpush1.msra.mxu0 %v156
    %776 = vmatprep.subr.mxu0 0.0
    %777 = vmatpush1.msra.mxu0 %v157
    %778 = vmatprep.subr.mxu0 0.0
    %779 = vmatpush1.msra.mxu0 %v158
    %780 = vmatprep.subr.mxu0 0.0
    %781 = vmatpush1.msra.mxu0 %v159
    %782 = vmatprep.subr.mxu0 0.0
    %783 = vmatpush1.msra.mxu0 %v160
    %784 = vmatprep.subr.mxu0 0.0
    %785 = vmatpush1.msra.mxu0 %v161
    %786 = vmatprep.subr.mxu0 0.0
    %787 = vmatpush1.msra.mxu0 %v162
    %788 = vmatprep.subr.mxu0 0.0
    %789 = vmatpush1.msra.mxu0 %v163
    %790 = vmatprep.subr.mxu0 0.0
    %791 = vmatpush1.msra.mxu0 %v164
    %792 = vmatprep.subr.mxu0 0.0
    %793 = vmatpush1.msra.mxu0 %v165
    %794 = vmatprep.subr.mxu0 0.0
    %795 = vmatpush1.msra.mxu0 %v166
    %796 = vmatprep.subr.mxu0 0.0
    %797 = vmatpush1.msra.mxu0 %v167
    %798 = vmatprep.subr.mxu0 0.0
    %799 = vmatpush1.msra.mxu0 %v168
    %800 = vmatprep.mubr.f32.mxu0 %v502
    %801 = vmatmul.mubr.f32.gmra.mrb[0].mxu0 %v494
    %v802 = vpop.f32.mrb[0].mxu0
    %v803 = vadd.f32 %v733, %v802
    %v804 = vpop.f32.mrb[0].mxu0
    %805 = vdwg.mxu0
    %806 = vmatprep.subr.mxu0 0.0
    %807 = vmatpush1.msra.mxu0 %v169
    %808 = vmatprep.subr.mxu0 0.0
    %809 = vmatpush1.msra.mxu0 %v170
    %810 = vmatprep.subr.mxu0 0.0
    %811 = vmatpush1.msra.mxu0 %v171
    %812 = vmatprep.subr.mxu0 0.0
    %813 = vmatpush1.msra.mxu0 %v172
    %814 = vmatprep.subr.mxu0 0.0
    %815 = vmatpush1.msra.mxu0 %v173
    %816 = vmatprep.subr.mxu0 0.0
    %817 = vmatpush1.msra.mxu0 %v174
    %818 = vmatprep.subr.mxu0 0.0
    %819 = vmatpush1.msra.mxu0 %v175
    %820 = vmatprep.subr.mxu0 0.0
    %821 = vmatpush1.msra.mxu0 %v176
    %822 = vmatprep.subr.mxu0 0.0
    %823 = vmatpush1.msra.mxu0 %v177
    %824 = vmatprep.subr.mxu0 0.0
    %825 = vmatpush1.msra.mxu0 %v178
    %826 = vmatprep.subr.mxu0 0.0
    %827 = vmatpush1.msra.mxu0 %v179
    %828 = vmatprep.subr.mxu0 0.0
    %829 = vmatpush1.msra.mxu0 %v180
    %830 = vmatprep.subr.mxu0 0.0
    %831 = vmatpush1.msra.mxu0 %v181
    %832 = vmatprep.subr.mxu0 0.0
    %833 = vmatpush1.msra.mxu0 %v182
    %834 = vmatprep.subr.mxu0 0.0
    %835 = vmatpush1.msra.mxu0 %v183
    %836 = vmatprep.subr.mxu0 0.0
    %837 = vmatpush1.msra.mxu0 %v184
    %838 = vmatprep.subr.mxu0 0.0
    %839 = vmatpush1.msra.mxu0 %v185
    %840 = vmatprep.subr.mxu0 0.0
    %841 = vmatpush1.msra.mxu0 %v186
    %842 = vmatprep.subr.mxu0 0.0
    %843 = vmatpush1.msra.mxu0 %v187
    %844 = vmatprep.subr.mxu0 0.0
    %845 = vmatpush1.msra.mxu0 %v188
    %846 = vmatprep.subr.mxu0 0.0
    %847 = vmatpush1.msra.mxu0 %v189
    %848 = vmatprep.subr.mxu0 0.0
    %849 = vmatpush1.msra.mxu0 %v190
    %850 = vmatprep.subr.mxu0 0.0
    %851 = vmatpush1.msra.mxu0 %v191
    %852 = vmatprep.subr.mxu0 0.0
    %853 = vmatpush1.msra.mxu0 %v192
    %854 = vmatprep.subr.mxu0 0.0
    %855 = vmatpush1.msra.mxu0 %v193
    %856 = vmatprep.subr.mxu0 0.0
    %857 = vmatpush1.msra.mxu0 %v194
    %858 = vmatprep.subr.mxu0 0.0
    %859 = vmatpush1.msra.mxu0 %v195
    %860 = vmatprep.subr.mxu0 0.0
    %861 = vmatpush1.msra.mxu0 %v196
    %862 = vmatprep.subr.mxu0 0.0
    %863 = vmatpush1.msra.mxu0 %v197
    %864 = vmatprep.subr.mxu0 0.0
    %865 = vmatpush1.msra.mxu0 %v198
    %866 = vmatprep.subr.mxu0 0.0
    %867 = vmatpush1.msra.mxu0 %v199
    %868 = vmatprep.subr.mxu0 0.0
    %869 = vmatpush1.msra.mxu0 %v200
    %870 = vmatprep.mubr.f32.mxu0 %v503
    %871 = vmatmul.mubr.f32.gmra.mrb[0].mxu0 %v501
    %v872 = vpop.f32.mrb[0].mxu0
    %v873 = vadd.f32 %v803, %v872
    %v874 = vpop.f32.mrb[0].mxu0
    %875 = vdwg.mxu0
    %876 = vmatprep.subr.mxu0 0.0
    %877 = vmatpush1.msra.mxu0 %v201
    %878 = vmatprep.subr.mxu0 0.0
    %879 = vmatpush1.msra.mxu0 %v202
    %880 = vmatprep.subr.mxu0 0.0
    %881 = vmatpush1.msra.mxu0 %v203
    %882 = vmatprep.subr.mxu0 0.0
    %883 = vmatpush1.msra.mxu0 %v204
    %884 = vmatprep.subr.mxu0 0.0
    %885 = vmatpush1.msra.mxu0 %v205
    %886 = vmatprep.subr.mxu0 0.0
    %887 = vmatpush1.msra.mxu0 %v206
    %888 = vmatprep.subr.mxu0 0.0
    %889 = vmatpush1.msra.mxu0 %v207
    %890 = vmatprep.subr.mxu0 0.0
    %891 = vmatpush1.msra.mxu0 %v208
    %892 = vmatprep.subr.mxu0 0.0
    %893 = vmatpush1.msra.mxu0 %v209
    %894 = vmatprep.subr.mxu0 0.0
    %895 = vmatpush1.msra.mxu0 %v210
    %896 = vmatprep.subr.mxu0 0.0
    %897 = vmatpush1.msra.mxu0 %v211
    %898 = vmatprep.subr.mxu0 0.0
    %899 = vmatpush1.msra.mxu0 %v212
    %900 = vmatprep.subr.mxu0 0.0
    %901 = vmatpush1.msra.mxu0 %v213
    %902 = vmatprep.subr.mxu0 0.0
    %903 = vmatpush1.msra.mxu0 %v214
    %904 = vmatprep.subr.mxu0 0.0
    %905 = vmatpush1.msra.mxu0 %v215
    %906 = vmatprep.subr.mxu0 0.0
    %907 = vmatpush1.msra.mxu0 %v216
    %908 = vmatprep.subr.mxu0 0.0
    %909 = vmatpush1.msra.mxu0 %v217
    %910 = vmatprep.subr.mxu0 0.0
    %911 = vmatpush1.msra.mxu0 %v218
    %912 = vmatprep.subr.mxu0 0.0
    %913 = vmatpush1.msra.mxu0 %v219
    %914 = vmatprep.subr.mxu0 0.0
    %915 = vmatpush1.msra.mxu0 %v220
    %916 = vmatprep.subr.mxu0 0.0
    %917 = vmatpush1.msra.mxu0 %v221
    %918 = vmatprep.subr.mxu0 0.0
    %919 = vmatpush1.msra.mxu0 %v222
    %920 = vmatprep.subr.mxu0 0.0
    %921 = vmatpush1.msra.mxu0 %v223
    %922 = vmatprep.subr.mxu0 0.0
    %923 = vmatpush1.msra.mxu0 %v224
    %924 = vmatprep.subr.mxu0 0.0
    %925 = vmatpush1.msra.mxu0 %v225
    %926 = vmatprep.subr.mxu0 0.0
    %927 = vmatpush1.msra.mxu0 %v226
    %928 = vmatprep.subr.mxu0 0.0
    %929 = vmatpush1.msra.mxu0 %v227
    %930 = vmatprep.subr.mxu0 0.0
    %931 = vmatpush1.msra.mxu0 %v228
    %932 = vmatprep.subr.mxu0 0.0
    %933 = vmatpush1.msra.mxu0 %v229
    %934 = vmatprep.subr.mxu0 0.0
    %935 = vmatpush1.msra.mxu0 %v230
    %936 = vmatprep.subr.mxu0 0.0
    %937 = vmatpush1.msra.mxu0 %v231
    %938 = vmatprep.subr.mxu0 0.0
    %939 = vmatpush1.msra.mxu0 %v232
    %940 = vmatprep.mubr.f32.mxu0 %v519
    %941 = vmatmul.mubr.f32.gmra.mrb[0].mxu0 %v511
    %v942 = vpop.f32.mrb[0].mxu0
    %v943 = vadd.f32 %v873, %v942
    %v944 = vpop.f32.mrb[0].mxu0
    %945 = vdwg.mxu0
    %946 = vmatprep.subr.mxu0 0.0
    %947 = vmatpush1.msra.mxu0 %v233
    %948 = vmatprep.subr.mxu0 0.0
    %949 = vmatpush1.msra.mxu0 %v234
    %950 = vmatprep.subr.mxu0 0.0
    %951 = vmatpush1.msra.mxu0 %v235
    %952 = vmatprep.subr.mxu0 0.0
    %953 = vmatpush1.msra.mxu0 %v236
    %954 = vmatprep.subr.mxu0 0.0
    %955 = vmatpush1.msra.mxu0 %v237
    %956 = vmatprep.subr.mxu0 0.0
    %957 = vmatpush1.msra.mxu0 %v238
    %958 = vmatprep.subr.mxu0 0.0
    %959 = vmatpush1.msra.mxu0 %v239
    %960 = vmatprep.subr.mxu0 0.0
    %961 = vmatpush1.msra.mxu0 %v240
    %962 = vmatprep.subr.mxu0 0.0
    %963 = vmatpush1.msra.mxu0 %v241
    %964 = vmatprep.subr.mxu0 0.0
    %965 = vmatpush1.msra.mxu0 %v242
    %966 = vmatprep.subr.mxu0 0.0
    %967 = vmatpush1.msra.mxu0 %v243
    %968 = vmatprep.subr.mxu0 0.0
    %969 = vmatpush1.msra.mxu0 %v244
    %970 = vmatprep.subr.mxu0 0.0
    %971 = vmatpush1.msra.mxu0 %v245
    %972 = vmatprep.subr.mxu0 0.0
    %973 = vmatpush1.msra.mxu0 %v246
    %974 = vmatprep.subr.mxu0 0.0
    %975 = vmatpush1.msra.mxu0 %v247
    %976 = vmatprep.subr.mxu0 0.0
    %977 = vmatpush1.msra.mxu0 %v248
    %978 = vmatprep.subr.mxu0 0.0
    %979 = vmatpush1.msra.mxu0 %v249
    %980 = vmatprep.subr.mxu0 0.0
    %981 = vmatpush1.msra.mxu0 %v250
    %982 = vmatprep.subr.mxu0 0.0
    %983 = vmatpush1.msra.mxu0 %v251
    %984 = vmatprep.subr.mxu0 0.0
    %985 = vmatpush1.msra.mxu0 %v252
    %986 = vmatprep.subr.mxu0 0.0
    %987 = vmatpush1.msra.mxu0 %v253
    %988 = vmatprep.subr.mxu0 0.0
    %989 = vmatpush1.msra.mxu0 %v254
    %990 = vmatprep.subr.mxu0 0.0
    %991 = vmatpush1.msra.mxu0 %v255
    %992 = vmatprep.subr.mxu0 0.0
    %993 = vmatpush1.msra.mxu0 %v256
    %994 = vmatprep.subr.mxu0 0.0
    %995 = vmatpush1.msra.mxu0 %v257
    %996 = vmatprep.subr.mxu0 0.0
    %997 = vmatpush1.msra.mxu0 %v258
    %998 = vmatprep.subr.mxu0 0.0
    %999 = vmatpush1.msra.mxu0 %v259
    %1000 = vmatprep.subr.mxu0 0.0
    %1001 = vmatpush1.msra.mxu0 %v260
    %1002 = vmatprep.subr.mxu0 0.0
    %1003 = vmatpush1.msra.mxu0 %v261
    %1004 = vmatprep.subr.mxu0 0.0
    %1005 = vmatpush1.msra.mxu0 %v262
    %1006 = vmatprep.subr.mxu0 0.0
    %1007 = vmatpush1.msra.mxu0 %v263
    %1008 = vmatprep.subr.mxu0 0.0
    %1009 = vmatpush1.msra.mxu0 %v264
    %1010 = vmatprep.mubr.f32.mxu0 %v520
    %1011 = vmatmul.mubr.f32.gmra.mrb[0].mxu0 %v518
    %v1012 = vpop.f32.mrb[0].mxu0
    %v1013 = vadd.f32 %v943, %v1012
    %v1014 = vpop.f32.mrb[0].mxu0
    %1015 = vdwg.mxu0
    %1016 = vmatprep.subr.mxu0 0.0
    %1017 = vmatpush1.msra.mxu0 %v265
    %1018 = vmatprep.subr.mxu0 0.0
    %1019 = vmatpush1.msra.mxu0 %v266
    %1020 = vmatprep.subr.mxu0 0.0
    %1021 = vmatpush1.msra.mxu0 %v267
    %1022 = vmatprep.subr.mxu0 0.0
    %1023 = vmatpush1.msra.mxu0 %v268
    %1024 = vmatprep.subr.mxu0 0.0
    %1025 = vmatpush1.msra.mxu0 %v269
    %1026 = vmatprep.subr.mxu0 0.0
    %1027 = vmatpush1.msra.mxu0 %v270
    %1028 = vmatprep.subr.mxu0 0.0
    %1029 = vmatpush1.msra.mxu0 %v271
    %1030 = vmatprep.subr.mxu0 0.0
    %1031 = vmatpush1.msra.mxu0 %v272
    %1032 = vmatprep.subr.mxu0 0.0
    %1033 = vmatpush1.msra.mxu0 %v273
    %1034 = vmatprep.subr.mxu0 0.0
    %1035 = vmatpush1.msra.mxu0 %v274
    %1036 = vmatprep.subr.mxu0 0.0
    %1037 = vmatpush1.msra.mxu0 %v275
    %1038 = vmatprep.subr.mxu0 0.0
    %1039 = vmatpush1.msra.mxu0 %v276
    %1040 = vmatprep.subr.mxu0 0.0
    %1041 = vmatpush1.msra.mxu0 %v277
    %1042 = vmatprep.subr.mxu0 0.0
    %1043 = vmatpush1.msra.mxu0 %v278
    %1044 = vmatprep.subr.mxu0 0.0
    %1045 = vmatpush1.msra.mxu0 %v279
    %1046 = vmatprep.subr.mxu0 0.0
    %1047 = vmatpush1.msra.mxu0 %v280
    %1048 = vmatprep.subr.mxu0 0.0
    %1049 = vmatpush1.msra.mxu0 %v281
    %1050 = vmatprep.subr.mxu0 0.0
    %1051 = vmatpush1.msra.mxu0 %v282
    %1052 = vmatprep.subr.mxu0 0.0
    %1053 = vmatpush1.msra.mxu0 %v283
    %1054 = vmatprep.subr.mxu0 0.0
    %1055 = vmatpush1.msra.mxu0 %v284
    %1056 = vmatprep.subr.mxu0 0.0
    %1057 = vmatpush1.msra.mxu0 %v285
    %1058 = vmatprep.subr.mxu0 0.0
    %1059 = vmatpush1.msra.mxu0 %v286
    %1060 = vmatprep.subr.mxu0 0.0
    %1061 = vmatpush1.msra.mxu0 %v287
    %1062 = vmatprep.subr.mxu0 0.0
    %1063 = vmatpush1.msra.mxu0 %v288
    %1064 = vmatprep.subr.mxu0 0.0
    %1065 = vmatpush1.msra.mxu0 %v289
    %1066 = vmatprep.subr.mxu0 0.0
    %1067 = vmatpush1.msra.mxu0 %v290
    %1068 = vmatprep.subr.mxu0 0.0
    %1069 = vmatpush1.msra.mxu0 %v291
    %1070 = vmatprep.subr.mxu0 0.0
    %1071 = vmatpush1.msra.mxu0 %v292
    %1072 = vmatprep.subr.mxu0 0.0
    %1073 = vmatpush1.msra.mxu0 %v293
    %1074 = vmatprep.subr.mxu0 0.0
    %1075 = vmatpush1.msra.mxu0 %v294
    %1076 = vmatprep.subr.mxu0 0.0
    %1077 = vmatpush1.msra.mxu0 %v295
    %1078 = vmatprep.subr.mxu0 0.0
    %1079 = vmatpush1.msra.mxu0 %v296
    %1080 = vmatprep.mubr.f32.mxu0 %v536
    %1081 = vmatmul.mubr.f32.gmra.mrb[0].mxu0 %v528
    %v1082 = vpop.f32.mrb[0].mxu0
    %v1083 = vadd.f32 %v1013, %v1082
    %v1084 = vpop.f32.mrb[0].mxu0
    %1085 = vdwg.mxu0
    %1086 = vmatprep.subr.mxu0 0.0
    %1087 = vmatpush1.msra.mxu0 %v297
    %1088 = vmatprep.subr.mxu0 0.0
    %1089 = vmatpush1.msra.mxu0 %v298
    %1090 = vmatprep.subr.mxu0 0.0
    %1091 = vmatpush1.msra.mxu0 %v299
    %1092 = vmatprep.subr.mxu0 0.0
    %1093 = vmatpush1.msra.mxu0 %v300
    %1094 = vmatprep.subr.mxu0 0.0
    %1095 = vmatpush1.msra.mxu0 %v301
    %1096 = vmatprep.subr.mxu0 0.0
    %1097 = vmatpush1.msra.mxu0 %v302
    %1098 = vmatprep.subr.mxu0 0.0
    %1099 = vmatpush1.msra.mxu0 %v303
    %1100 = vmatprep.subr.mxu0 0.0
    %1101 = vmatpush1.msra.mxu0 %v304
    %1102 = vmatprep.subr.mxu0 0.0
    %1103 = vmatpush1.msra.mxu0 %v305
    %1104 = vmatprep.subr.mxu0 0.0
    %1105 = vmatpush1.msra.mxu0 %v306
    %1106 = vmatprep.subr.mxu0 0.0
    %1107 = vmatpush1.msra.mxu0 %v307
    %1108 = vmatprep.subr.mxu0 0.0
    %1109 = vmatpush1.msra.mxu0 %v308
    %1110 = vmatprep.subr.mxu0 0.0
    %1111 = vmatpush1.msra.mxu0 %v309
    %1112 = vmatprep.subr.mxu0 0.0
    %1113 = vmatpush1.msra.mxu0 %v310
    %1114 = vmatprep.subr.mxu0 0.0
    %1115 = vmatpush1.msra.mxu0 %v311
    %1116 = vmatprep.subr.mxu0 0.0
    %1117 = vmatpush1.msra.mxu0 %v312
    %1118 = vmatprep.subr.mxu0 0.0
    %1119 = vmatpush1.msra.mxu0 %v313
    %1120 = vmatprep.subr.mxu0 0.0
    %1121 = vmatpush1.msra.mxu0 %v314
    %1122 = vmatprep.subr.mxu0 0.0
    %1123 = vmatpush1.msra.mxu0 %v315
    %1124 = vmatprep.subr.mxu0 0.0
    %1125 = vmatpush1.msra.mxu0 %v316
    %1126 = vmatprep.subr.mxu0 0.0
    %1127 = vmatpush1.msra.mxu0 %v317
    %1128 = vmatprep.subr.mxu0 0.0
    %1129 = vmatpush1.msra.mxu0 %v318
    %1130 = vmatprep.subr.mxu0 0.0
    %1131 = vmatpush1.msra.mxu0 %v319
    %1132 = vmatprep.subr.mxu0 0.0
    %1133 = vmatpush1.msra.mxu0 %v320
    %1134 = vmatprep.subr.mxu0 0.0
    %1135 = vmatpush1.msra.mxu0 %v321
    %1136 = vmatprep.subr.mxu0 0.0
    %1137 = vmatpush1.msra.mxu0 %v322
    %1138 = vmatprep.subr.mxu0 0.0
    %1139 = vmatpush1.msra.mxu0 %v323
    %1140 = vmatprep.subr.mxu0 0.0
    %1141 = vmatpush1.msra.mxu0 %v324
    %1142 = vmatprep.subr.mxu0 0.0
    %1143 = vmatpush1.msra.mxu0 %v325
    %1144 = vmatprep.subr.mxu0 0.0
    %1145 = vmatpush1.msra.mxu0 %v326
    %1146 = vmatprep.subr.mxu0 0.0
    %1147 = vmatpush1.msra.mxu0 %v327
    %1148 = vmatprep.subr.mxu0 0.0
    %1149 = vmatpush1.msra.mxu0 %v328
    %1150 = vmatprep.mubr.f32.mxu0 %v537
    %1151 = vmatmul.mubr.f32.gmra.mrb[0].mxu0 %v535
    %v1152 = vpop.f32.mrb[0].mxu0
    %v1153 = vadd.f32 %v1083, %v1152
    %v1154 = vpop.f32.mrb[0].mxu0
    %1155 = vdwg.mxu0
    %1156 = vmatprep.subr.mxu0 0.0
    %1157 = vmatpush1.msra.mxu0 %v329
    %1158 = vmatprep.subr.mxu0 0.0
    %1159 = vmatpush1.msra.mxu0 %v330
    %1160 = vmatprep.subr.mxu0 0.0
    %1161 = vmatpush1.msra.mxu0 %v331
    %1162 = vmatprep.subr.mxu0 0.0
    %1163 = vmatpush1.msra.mxu0 %v332
    %1164 = vmatprep.subr.mxu0 0.0
    %1165 = vmatpush1.msra.mxu0 %v333
    %1166 = vmatprep.subr.mxu0 0.0
    %1167 = vmatpush1.msra.mxu0 %v334
    %1168 = vmatprep.subr.mxu0 0.0
    %1169 = vmatpush1.msra.mxu0 %v335
    %1170 = vmatprep.subr.mxu0 0.0
    %1171 = vmatpush1.msra.mxu0 %v336
    %1172 = vmatprep.subr.mxu0 0.0
    %1173 = vmatpush1.msra.mxu0 %v337
    %1174 = vmatprep.subr.mxu0 0.0
    %1175 = vmatpush1.msra.mxu0 %v338
    %1176 = vmatprep.subr.mxu0 0.0
    %1177 = vmatpush1.msra.mxu0 %v339
    %1178 = vmatprep.subr.mxu0 0.0
    %1179 = vmatpush1.msra.mxu0 %v340
    %1180 = vmatprep.subr.mxu0 0.0
    %1181 = vmatpush1.msra.mxu0 %v341
    %1182 = vmatprep.subr.mxu0 0.0
    %1183 = vmatpush1.msra.mxu0 %v342
    %1184 = vmatprep.subr.mxu0 0.0
    %1185 = vmatpush1.msra.mxu0 %v343
    %1186 = vmatprep.subr.mxu0 0.0
    %1187 = vmatpush1.msra.mxu0 %v344
    %1188 = vmatprep.subr.mxu0 0.0
    %1189 = vmatpush1.msra.mxu0 %v345
    %1190 = vmatprep.subr.mxu0 0.0
    %1191 = vmatpush1.msra.mxu0 %v346
    %1192 = vmatprep.subr.mxu0 0.0
    %1193 = vmatpush1.msra.mxu0 %v347
    %1194 = vmatprep.subr.mxu0 0.0
    %1195 = vmatpush1.msra.mxu0 %v348
    %1196 = vmatprep.subr.mxu0 0.0
    %1197 = vmatpush1.msra.mxu0 %v349
    %1198 = vmatprep.subr.mxu0 0.0
    %1199 = vmatpush1.msra.mxu0 %v350
    %1200 = vmatprep.subr.mxu0 0.0
    %1201 = vmatpush1.msra.mxu0 %v351
    %1202 = vmatprep.subr.mxu0 0.0
    %1203 = vmatpush1.msra.mxu0 %v352
    %1204 = vmatprep.subr.mxu0 0.0
    %1205 = vmatpush1.msra.mxu0 %v353
    %1206 = vmatprep.subr.mxu0 0.0
    %1207 = vmatpush1.msra.mxu0 %v354
    %1208 = vmatprep.subr.mxu0 0.0
    %1209 = vmatpush1.msra.mxu0 %v355
    %1210 = vmatprep.subr.mxu0 0.0
    %1211 = vmatpush1.msra.mxu0 %v356
    %1212 = vmatprep.subr.mxu0 0.0
    %1213 = vmatpush1.msra.mxu0 %v357
    %1214 = vmatprep.subr.mxu0 0.0
    %1215 = vmatpush1.msra.mxu0 %v358
    %1216 = vmatprep.subr.mxu0 0.0
    %1217 = vmatpush1.msra.mxu0 %v359
    %1218 = vmatprep.subr.mxu0 0.0
    %1219 = vmatpush1.msra.mxu0 %v360
    %1220 = vmatprep.mubr.f32.mxu0 %v553
    %1221 = vmatmul.mubr.f32.gmra.mrb[0].mxu0 %v545
    %v1222 = vpop.f32.mrb[0].mxu0
    %v1223 = vadd.f32 %v1153, %v1222
    %v1224 = vpop.f32.mrb[0].mxu0
    %1225 = vdwg.mxu0
    %1226 = vmatprep.subr.mxu0 0.0
    %1227 = vmatpush1.msra.mxu0 %v361
    %1228 = vmatprep.subr.mxu0 0.0
    %1229 = vmatpush1.msra.mxu0 %v362
    %1230 = vmatprep.subr.mxu0 0.0
    %1231 = vmatpush1.msra.mxu0 %v363
    %1232 = vmatprep.subr.mxu0 0.0
    %1233 = vmatpush1.msra.mxu0 %v364
    %1234 = vmatprep.subr.mxu0 0.0
    %1235 = vmatpush1.msra.mxu0 %v365
    %1236 = vmatprep.subr.mxu0 0.0
    %1237 = vmatpush1.msra.mxu0 %v366
    %1238 = vmatprep.subr.mxu0 0.0
    %1239 = vmatpush1.msra.mxu0 %v367
    %1240 = vmatprep.subr.mxu0 0.0
    %1241 = vmatpush1.msra.mxu0 %v368
    %1242 = vmatprep.subr.mxu0 0.0
    %1243 = vmatpush1.msra.mxu0 %v369
    %1244 = vmatprep.subr.mxu0 0.0
    %1245 = vmatpush1.msra.mxu0 %v370
    %1246 = vmatprep.subr.mxu0 0.0
    %1247 = vmatpush1.msra.mxu0 %v371
    %1248 = vmatprep.subr.mxu0 0.0
    %1249 = vmatpush1.msra.mxu0 %v372
    %1250 = vmatprep.subr.mxu0 0.0
    %1251 = vmatpush1.msra.mxu0 %v373
    %1252 = vmatprep.subr.mxu0 0.0
    %1253 = vmatpush1.msra.mxu0 %v374
    %1254 = vmatprep.subr.mxu0 0.0
    %1255 = vmatpush1.msra.mxu0 %v375
    %1256 = vmatprep.subr.mxu0 0.0
    %1257 = vmatpush1.msra.mxu0 %v376
    %1258 = vmatprep.subr.mxu0 0.0
    %1259 = vmatpush1.msra.mxu0 %v377
    %1260 = vmatprep.subr.mxu0 0.0
    %1261 = vmatpush1.msra.mxu0 %v378
    %1262 = vmatprep.subr.mxu0 0.0
    %1263 = vmatpush1.msra.mxu0 %v379
    %1264 = vmatprep.subr.mxu0 0.0
    %1265 = vmatpush1.msra.mxu0 %v380
    %1266 = vmatprep.subr.mxu0 0.0
    %1267 = vmatpush1.msra.mxu0 %v381
    %1268 = vmatprep.subr.mxu0 0.0
    %1269 = vmatpush1.msra.mxu0 %v382
    %1270 = vmatprep.subr.mxu0 0.0
    %1271 = vmatpush1.msra.mxu0 %v383
    %1272 = vmatprep.subr.mxu0 0.0
    %1273 = vmatpush1.msra.mxu0 %v384
    %1274 = vmatprep.subr.mxu0 0.0
    %1275 = vmatpush1.msra.mxu0 %v385
    %1276 = vmatprep.subr.mxu0 0.0
    %1277 = vmatpush1.msra.mxu0 %v386
    %1278 = vmatprep.subr.mxu0 0.0
    %1279 = vmatpush1.msra.mxu0 %v387
    %1280 = vmatprep.subr.mxu0 0.0
    %1281 = vmatpush1.msra.mxu0 %v388
    %1282 = vmatprep.subr.mxu0 0.0
    %1283 = vmatpush1.msra.mxu0 %v389
    %1284 = vmatprep.subr.mxu0 0.0
    %1285 = vmatpush1.msra.mxu0 %v390
    %1286 = vmatprep.subr.mxu0 0.0
    %1287 = vmatpush1.msra.mxu0 %v391
    %1288 = vmatprep.subr.mxu0 0.0
    %1289 = vmatpush1.msra.mxu0 %v392
    %1290 = vmatprep.mubr.f32.mxu0 %v554
    %1291 = vmatmul.mubr.f32.gmra.mrb[0].mxu0 %v552
    %v1292 = vpop.f32.mrb[0].mxu0
    %v1293 = vadd.f32 %v1223, %v1292
    %v1294 = vpop.f32.mrb[0].mxu0
    %1295 = vdwg.mxu0
    %1296 = vmatprep.subr.mxu0 0.0
    %1297 = vmatpush1.msra.mxu0 %v393
    %1298 = vmatprep.subr.mxu0 0.0
    %1299 = vmatpush1.msra.mxu0 %v394
    %1300 = vmatprep.subr.mxu0 0.0
    %1301 = vmatpush1.msra.mxu0 %v395
    %1302 = vmatprep.subr.mxu0 0.0
    %1303 = vmatpush1.msra.mxu0 %v396
    %1304 = vmatprep.subr.mxu0 0.0
    %1305 = vmatpush1.msra.mxu0 %v397
    %1306 = vmatprep.subr.mxu0 0.0
    %1307 = vmatpush1.msra.mxu0 %v398
    %1308 = vmatprep.subr.mxu0 0.0
    %1309 = vmatpush1.msra.mxu0 %v399
    %1310 = vmatprep.subr.mxu0 0.0
    %1311 = vmatpush1.msra.mxu0 %v400
    %1312 = vmatprep.subr.mxu0 0.0
    %1313 = vmatpush1.msra.mxu0 %v401
    %1314 = vmatprep.subr.mxu0 0.0
    %1315 = vmatpush1.msra.mxu0 %v402
    %1316 = vmatprep.subr.mxu0 0.0
    %1317 = vmatpush1.msra.mxu0 %v403
    %1318 = vmatprep.subr.mxu0 0.0
    %1319 = vmatpush1.msra.mxu0 %v404
    %1320 = vmatprep.subr.mxu0 0.0
    %1321 = vmatpush1.msra.mxu0 %v405
    %1322 = vmatprep.subr.mxu0 0.0
    %1323 = vmatpush1.msra.mxu0 %v406
    %1324 = vmatprep.subr.mxu0 0.0
    %1325 = vmatpush1.msra.mxu0 %v407
    %1326 = vmatprep.subr.mxu0 0.0
    %1327 = vmatpush1.msra.mxu0 %v408
    %1328 = vmatprep.subr.mxu0 0.0
    %1329 = vmatpush1.msra.mxu0 %v409
    %1330 = vmatprep.subr.mxu0 0.0
    %1331 = vmatpush1.msra.mxu0 %v410
    %1332 = vmatprep.subr.mxu0 0.0
    %1333 = vmatpush1.msra.mxu0 %v411
    %1334 = vmatprep.subr.mxu0 0.0
    %1335 = vmatpush1.msra.mxu0 %v412
    %1336 = vmatprep.subr.mxu0 0.0
    %1337 = vmatpush1.msra.mxu0 %v413
    %1338 = vmatprep.subr.mxu0 0.0
    %1339 = vmatpush1.msra.mxu0 %v414
    %1340 = vmatprep.subr.mxu0 0.0
    %1341 = vmatpush1.msra.mxu0 %v415
    %1342 = vmatprep.subr.mxu0 0.0
    %1343 = vmatpush1.msra.mxu0 %v416
    %1344 = vmatprep.subr.mxu0 0.0
    %1345 = vmatpush1.msra.mxu0 %v417
    %1346 = vmatprep.subr.mxu0 0.0
    %1347 = vmatpush1.msra.mxu0 %v418
    %1348 = vmatprep.subr.mxu0 0.0
    %1349 = vmatpush1.msra.mxu0 %v419
    %1350 = vmatprep.subr.mxu0 0.0
    %1351 = vmatpush1.msra.mxu0 %v420
    %1352 = vmatprep.subr.mxu0 0.0
    %1353 = vmatpush1.msra.mxu0 %v421
    %1354 = vmatprep.subr.mxu0 0.0
    %1355 = vmatpush1.msra.mxu0 %v422
    %1356 = vmatprep.subr.mxu0 0.0
    %1357 = vmatpush1.msra.mxu0 %v423
    %1358 = vmatprep.subr.mxu0 0.0
    %1359 = vmatpush1.msra.mxu0 %v424
    %1360 = vmatprep.mubr.f32.mxu0 %v570
    %1361 = vmatmul.mubr.f32.gmra.mrb[0].mxu0 %v562
    %v1362 = vpop.f32.mrb[0].mxu0
    %v1363 = vadd.f32 %v1293, %v1362
    %v1364 = vpop.f32.mrb[0].mxu0
    %1365 = vdwg.mxu0
    %1366 = vmatprep.subr.mxu0 0.0
    %1367 = vmatpush1.msra.mxu0 %v425
    %1368 = vmatprep.subr.mxu0 0.0
    %1369 = vmatpush1.msra.mxu0 %v426
    %1370 = vmatprep.subr.mxu0 0.0
    %1371 = vmatpush1.msra.mxu0 %v427
    %1372 = vmatprep.subr.mxu0 0.0
    %1373 = vmatpush1.msra.mxu0 %v428
    %1374 = vmatprep.subr.mxu0 0.0
    %1375 = vmatpush1.msra.mxu0 %v429
    %1376 = vmatprep.subr.mxu0 0.0
    %1377 = vmatpush1.msra.mxu0 %v430
    %1378 = vmatprep.subr.mxu0 0.0
    %1379 = vmatpush1.msra.mxu0 %v431
    %1380 = vmatprep.subr.mxu0 0.0
    %1381 = vmatpush1.msra.mxu0 %v432
    %1382 = vmatprep.subr.mxu0 0.0
    %1383 = vmatpush1.msra.mxu0 %v433
    %1384 = vmatprep.subr.mxu0 0.0
    %1385 = vmatpush1.msra.mxu0 %v434
    %1386 = vmatprep.subr.mxu0 0.0
    %1387 = vmatpush1.msra.mxu0 %v435
    %1388 = vmatprep.subr.mxu0 0.0
    %1389 = vmatpush1.msra.mxu0 %v436
    %1390 = vmatprep.subr.mxu0 0.0
    %1391 = vmatpush1.msra.mxu0 %v437
    %1392 = vmatprep.subr.mxu0 0.0
    %1393 = vmatpush1.msra.mxu0 %v438
    %1394 = vmatprep.subr.mxu0 0.0
    %1395 = vmatpush1.msra.mxu0 %v439
    %1396 = vmatprep.subr.mxu0 0.0
    %1397 = vmatpush1.msra.mxu0 %v440
    %1398 = vmatprep.subr.mxu0 0.0
    %1399 = vmatpush1.msra.mxu0 %v441
    %1400 = vmatprep.subr.mxu0 0.0
    %1401 = vmatpush1.msra.mxu0 %v442
    %1402 = vmatprep.subr.mxu0 0.0
    %1403 = vmatpush1.msra.mxu0 %v443
    %1404 = vmatprep.subr.mxu0 0.0
    %1405 = vmatpush1.msra.mxu0 %v444
    %1406 = vmatprep.subr.mxu0 0.0
    %1407 = vmatpush1.msra.mxu0 %v445
    %1408 = vmatprep.subr.mxu0 0.0
    %1409 = vmatpush1.msra.mxu0 %v446
    %1410 = vmatprep.subr.mxu0 0.0
    %1411 = vmatpush1.msra.mxu0 %v447
    %1412 = vmatprep.subr.mxu0 0.0
    %1413 = vmatpush1.msra.mxu0 %v448
    %1414 = vmatprep.subr.mxu0 0.0
    %1415 = vmatpush1.msra.mxu0 %v449
    %1416 = vmatprep.subr.mxu0 0.0
    %1417 = vmatpush1.msra.mxu0 %v450
    %1418 = vmatprep.subr.mxu0 0.0
    %1419 = vmatpush1.msra.mxu0 %v451
    %1420 = vmatprep.subr.mxu0 0.0
    %1421 = vmatpush1.msra.mxu0 %v452
    %1422 = vmatprep.subr.mxu0 0.0
    %1423 = vmatpush1.msra.mxu0 %v453
    %1424 = vmatprep.subr.mxu0 0.0
    %1425 = vmatpush1.msra.mxu0 %v454
    %1426 = vmatprep.subr.mxu0 0.0
    %1427 = vmatpush1.msra.mxu0 %v455
    %1428 = vmatprep.subr.mxu0 0.0
    %1429 = vmatpush1.msra.mxu0 %v456
    %1430 = vmatprep.mubr.f32.mxu0 %v571
    %1431 = vmatmul.mubr.f32.gmra.mrb[0].mxu0 %v569
    %v1432 = vpop.f32.mrb[0].mxu0
    %v1433 = vadd.f32 %v1363, %v1432
    %v1434 = vpop.f32.mrb[0].mxu0
    %1435 = vdwg.mxu0
    %v1436 = vld [vmem:[#allocation8] sm:$0x1]
    %v1437 = vlaneseq
    %v1438 = vshrl.u32 %v1437, 7
    %v1439 = vsub.s32 0, %v1438
    %v1440 = vrot.slane %v1436, %v1439
    %v1441 = vadd.f32 %v1433, %v1440
    %vm1442 = vcmask 1041408
    %v1443 = vsel %vm1442, %v1441, -inf
    %1444 = vmax.xlane.f32.xlu0 %v1443
    %v1445 = vpop.xlane.xlu0 %1444
    %v1446 = vsub.f32 %v1441, %v1445
    %v1447 = vmul.f32 %v1446, 1.442695
    %v1448 = vpow.pop %v1447
    %v1449 = vsel %vm1442, %v1448, 0.0
    %1450 = vadd.xlane.f32.xlu0 %v1449
    %v1451 = vpop.xlane.xlu0 %1450
    %v1452 = vrcp.pop %v1451
    %v1453 = vmul.f32 1.0, %v1452
    %v1454 = vmul.f32 %v1448, %v1453
    %v1455 = vld [vmem:[#allocation8 + $0x1] sm:$0x1]
    %v1456 = vlaneseq
    %v1457 = vshrl.u32 %v1456, 7
    %v1458 = vsub.s32 0, %v1457
    %v1459 = vrot.slane %v1455, %v1458
    %v1460 = vadd.f32 %v1433, %v1459
    %v1461 = vsel %vm1442, %v1460, -inf
    %1462 = vmax.xlane.f32.xlu0 %v1461
    %v1463 = vpop.xlane.xlu0 %1462
    %v1464 = vsub.f32 %v1460, %v1463
    %v1465 = vmul.f32 %v1464, 1.442695
    %v1466 = vpow.pop %v1465
    %v1467 = vsel %vm1442, %v1466, 0.0
    %1468 = vadd.xlane.f32.xlu0 %v1467
    %v1469 = vpop.xlane.xlu0 %1468
    %v1470 = vrcp.pop %v1469
    %v1471 = vmul.f32 1.0, %v1470
    %v1472 = vmul.f32 %v1466, %v1471
    %v1473 = vadd.f32 %v1454, %v1472
    %v1474 = vld [vmem:[#allocation8 + $0x2] sm:$0x1]
    %v1475 = vlaneseq
    %v1476 = vshrl.u32 %v1475, 7
    %v1477 = vsub.s32 0, %v1476
    %v1478 = vrot.slane %v1474, %v1477
    %v1479 = vadd.f32 %v1433, %v1478
    %v1480 = vsel %vm1442, %v1479, -inf
    %1481 = vmax.xlane.f32.xlu0 %v1480
    %v1482 = vpop.xlane.xlu0 %1481
    %v1483 = vsub.f32 %v1479, %v1482
    %v1484 = vmul.f32 %v1483, 1.442695
    %v1485 = vpow.pop %v1484
    %v1486 = vsel %vm1442, %v1485, 0.0
    %1487 = vadd.xlane.f32.xlu0 %v1486
    %v1488 = vpop.xlane.xlu0 %1487
    %v1489 = vrcp.pop %v1488
    %v1490 = vmul.f32 1.0, %v1489
    %v1491 = vmul.f32 %v1485, %v1490
    %v1492 = vadd.f32 %v1473, %v1491
    %v1493 = vld [vmem:[#allocation8 + $0x3] sm:$0x1]
    %v1494 = vlaneseq
    %v1495 = vshrl.u32 %v1494, 7
    %v1496 = vsub.s32 0, %v1495
    %v1497 = vrot.slane %v1493, %v1496
    %v1498 = vadd.f32 %v1433, %v1497
    %v1499 = vsel %vm1442, %v1498, -inf
    %1500 = vmax.xlane.f32.xlu0 %v1499
    %v1501 = vpop.xlane.xlu0 %1500
    %v1502 = vsub.f32 %v1498, %v1501
    %v1503 = vmul.f32 %v1502, 1.442695
    %v1504 = vpow.pop %v1503
    %v1505 = vsel %vm1442, %v1504, 0.0
    %1506 = vadd.xlane.f32.xlu0 %v1505
    %v1507 = vpop.xlane.xlu0 %1506
    %v1508 = vrcp.pop %v1507
    %v1509 = vmul.f32 1.0, %v1508
    %v1510 = vmul.f32 %v1504, %v1509
    %v1511 = vadd.f32 %v1492, %v1510
    %v1512 = vld [vmem:[#allocation8 + $0x4] sm:$0x1]
    %v1513 = vlaneseq
    %v1514 = vshrl.u32 %v1513, 7
    %v1515 = vsub.s32 0, %v1514
    %v1516 = vrot.slane %v1512, %v1515
    %v1517 = vadd.f32 %v1433, %v1516
    %v1518 = vsel %vm1442, %v1517, -inf
    %1519 = vmax.xlane.f32.xlu0 %v1518
    %v1520 = vpop.xlane.xlu0 %1519
    %v1521 = vsub.f32 %v1517, %v1520
    %v1522 = vmul.f32 %v1521, 1.442695
    %v1523 = vpow.pop %v1522
    %v1524 = vsel %vm1442, %v1523, 0.0
    %1525 = vadd.xlane.f32.xlu0 %v1524
    %v1526 = vpop.xlane.xlu0 %1525
    %v1527 = vrcp.pop %v1526
    %v1528 = vmul.f32 1.0, %v1527
    %v1529 = vmul.f32 %v1523, %v1528
    %v1530 = vadd.f32 %v1511, %v1529
    %v1531 = vmul.f32 %v1530, 0.2
    %1532 = vst [vmem:[#allocation10] sm:$0x3] %v1531
    // Predicated region
    $region34: #{tpu_custom_call.1} parent=1 // pred_check
      _
    $region35: #{tpu_custom_call.1} parent=1 // pred_check_branch
      %1534 = sbr.rel (0) target = $region37
    $region36: #{tpu_custom_call.1} parent=1 // pred_region
      %s1536 = ssub.s32 32, 32
      %1537 = vsyncadd [#allocation4], %s1536
      %s1539 = sshll.u32 [#allocation10], 4
      %s1540 = int_to_ptr.vmem [resolvable:$true] %s1539
      %1542 = dma.vmem_to_hbm [thread:$0]  %s1540, 32, %s4, [#allocation4]
    $region37: #{tpu_custom_call.1} parent=1 // pred_fallthru
      _
    // Predicated region
    $region38: #{tpu_custom_call.1} parent=1 // pred_check
      _
    $region39: #{tpu_custom_call.1} parent=1 // pred_check_branch
      %1544 = sbr.rel (0) target = $region41
    $region40: #{tpu_custom_call.1} parent=1 // pred_region
      %1545 = dma.done [#allocation4], 32
    $region41: #{tpu_custom_call.1} parent=1 // pred_fallthru
      _
    %1546 = vsyncpa [#allocation3], 1
    %1547 = vsyncpa [#allocation6], 1
    %1548 = vsyncpa [#allocation9], 1
    %1549 = vsyncpa [#allocation4], 1

</llo_original>
